<compile_context>
chip_gen: v6e
topology: v6e:2x2x1
jax: 0.10.0
libtpu: 0.0.40
codegen_flags: <defaults>
</compile_context>

<pallas_src>
import math
import functools

import jax
import jax.numpy as jnp
from jax.experimental import pallas as pl
from jax.experimental.pallas import tpu as pltpu


# --------------------------------------------------------------------------- kernel ----
def _cross_attn_kernel(*refs, n_heads: int, head_dim: int, kv_fused: bool,
                       need_weights: bool):
    if kv_fused:
        (q_ref, kv_ref, wq_ref, wkv_ref, wo_ref, vec_ref, *out_refs) = refs
        k_src = kv_ref
    else:
        (q_ref, k_ref, v_ref, wq_ref, wk_ref, wv_ref, wo_ref, vec_ref, *out_refs) = refs
        k_src = k_ref
    out_ref = out_refs[0]
    attw_ref = out_refs[1] if need_weights else None

    bt, lq, d = q_ref.shape
    lk = k_src.shape[1]
    f32 = jnp.float32
    cdt = wq_ref.dtype                    # MXU operand dtype (bf16 default, f32 opt-in)

    vec = vec_ref[...]                    # (8, D) f32 rows: bq, bk, bv, bo, gamma, beta, 0, 0
    bq, bk, bv = vec[0:1, :], vec[1:2, :], vec[2:3, :]
    bo, gamma, beta = vec[3:4, :], vec[4:5, :], vec[5:6, :]

    # ---- input projections on row-folded (Bt*L, D) operands ----
    q_in = q_ref[...]                     # kept in input precision for the residual
    q2 = q_in.reshape(bt * lq, d).astype(cdt)
    q = jnp.dot(q2, wq_ref[...], preferred_element_type=f32) + bq      # (bt*lq, d) f32
    if kv_fused:
        kv2 = kv_ref[...].reshape(bt * lk, d).astype(cdt)
        kvp = jnp.dot(kv2, wkv_ref[...], preferred_element_type=f32)   # (bt*lk, 2d)
        k = kvp[:, :d] + bk
        v = kvp[:, d:] + bv
    else:
        k2 = k_ref[...].reshape(bt * lk, d).astype(cdt)
        v2 = v_ref[...].reshape(bt * lk, d).astype(cdt)
        k = jnp.dot(k2, wk_ref[...], preferred_element_type=f32) + bk
        v = jnp.dot(v2, wv_ref[...], preferred_element_type=f32) + bv

    scale = 1.0 / math.sqrt(head_dim)
    qc = (q * scale).reshape(bt, lq, d).astype(cdt)   # scale once == per-head scaling
    kc = k.reshape(bt, lk, d).astype(cdt)
    vc = v.reshape(bt, lk, d).astype(cdt)

    # ---- per-head scores (rank-3 dot_general, single batch dim) ----
    # TODO(synk): a single dot_general with batch dims ((0,2),(0,2)) over a (bt,L,H,hd)
    # layout would also remove the per-head lane slices, but multi-batch-dim dot_general
    # is not reliably lowered by Mosaic, so the MXU contractions keep a small static loop.
    s_heads = []
    for h in range(n_heads):
        lo = h * head_dim
        s_heads.append(jax.lax.dot_general(
            qc[:, :, lo:lo + head_dim], kc[:, :, lo:lo + head_dim],
            (((2,), (2,)), ((0,), (0,))), preferred_element_type=f32))  # (bt, lq, lk)

    # ---- ONE softmax pass over all heads (stacked along the leading axis) ----
    s_all = jnp.concatenate(s_heads, axis=0)                            # (H*bt, lq, lk)
    s_all = s_all - jnp.max(s_all, axis=-1, keepdims=True)
    p_all = jnp.exp(s_all)
    denom = jnp.sum(p_all, axis=-1, keepdims=True)
    if need_weights:
        p_all = p_all / denom                       # exact: returned rows sum to 1
    else:
        p_all = p_all * pl.reciprocal(denom, approx=True)   # EUP slot, ~free

    # ---- P @ V per head, heads concatenated into their static lane slots ----
    o_heads = []
    for h in range(n_heads):
        lo = h * head_dim
        p_h = p_all[h * bt:(h + 1) * bt]                                # (bt, lq, lk)
        o_heads.append(jax.lax.dot_general(
            p_h.astype(cdt), vc[:, :, lo:lo + head_dim],
            (((2,), (1,)), ((0,), (0,))), preferred_element_type=f32))  # (bt, lq, hd)
    o_cat = jnp.concatenate(o_heads, axis=-1)                           # (bt, lq, d)

    # ---- ONE out-projection matmul with contraction depth D ----
    attn = jnp.dot(o_cat.reshape(bt * lq, d).astype(cdt), wo_ref[...],
                   preferred_element_type=f32) + bo                     # (bt*lq, d)
    attn3 = attn.reshape(bt, lq, d)

    # ---- residual (original-precision query) + LayerNorm, all f32; dropout = identity ----
    resid = q_in.astype(f32) + attn3
    mean = jnp.mean(resid, axis=-1, keepdims=True)
    var = jnp.mean((resid - mean) ** 2, axis=-1, keepdims=True)
    normed = (resid - mean) * jax.lax.rsqrt(var + 1e-5)
    result = normed * gamma + beta                                      # (bt, lq, d)

    # lane-dense writeback
    out_ref[...] = result.reshape(bt, 1, lq * d).astype(out_ref.dtype)
    if attw_ref is not None:
        acc = p_all[0:bt]
        for h in range(1, n_heads):
            acc = acc + p_all[h * bt:(h + 1) * bt]
        attw = acc * (1.0 / n_heads)                                    # (bt, lq, lk)
        attw_ref[...] = attw.reshape(bt, 1, lq * lk).astype(attw_ref.dtype)


# ------------------------------------------------------------------------ heuristics ----
def _num_tensorcores() -> int:
    """Best-effort TensorCore-per-chip count (v7x has 2); defaults to 1."""
    try:
        info = pltpu.get_tpu_info()
        for name in ("num_tensorcores", "tensorcores_per_chip", "cores_per_chip",
                     "num_cores"):
            val = getattr(info, name, None)
            if isinstance(val, int) and val > 0:
                return val
    except Exception:
        pass
    try:
        kind = jax.devices()[0].device_kind.lower()
        if "v7" in kind or "7x" in kind:
            return 2
    except Exception:
        pass
    return 1


def _pick_block_b(B, Lq, Lk, D, need_weights, itemsize, kv_fused) -> int:
    """Batch elements per grid step. Small batches run as ONE step (grid is a sequential
    loop on a single TensorCore); only split when >= 2 TCs AND per-step work is large."""
    n_kv = 1 if kv_fused else 2
    per_b = 2 * (2 * Lq * D + n_kv * Lk * D) * itemsize        # double-buffered q/kv/out
    if need_weights:
        per_b += 2 * Lq * Lk * 4
    budget = 12 * 1024 * 1024
    bt = max(1, min(B, budget // max(per_b, 1)))
    while B % bt:
        bt -= 1
    if _num_tensorcores() >= 2 and B > 1 and B // bt < 2:
        flops_per_elem = 2 * D * D * (2 * Lq + 2 * Lk) + 4 * Lq * Lk * D
        half = max(b for b in range(1, B // 2 + 1) if B % b == 0)
        if half * flops_per_elem >= 8_000_000:       # amortizes ~0.35us/step overhead
            bt = half
    return max(bt, 1)


def _vmem_estimate_bytes(bt, Lq, Lk, D, H, need_weights, kv_fused, w_isz, x_isz) -> int:
    n_kv = 1 if kv_fused else 2
    weights = 4 * D * D * w_isz + 8 * D * 4                    # single-buffered weights+vec
    blocks = 2 * (2 * bt * Lq * D * x_isz + n_kv * bt * Lk * D * x_isz)
    if need_weights:
        blocks += 2 * bt * Lq * Lk * 4
    interm = 4 * (4 * bt * Lq * D + 2 * bt * Lk * D + 3 * bt * H * Lq * Lk)
    return weights + blocks + interm


# --------------------------------------------------------------------------- wrapper ----
def cross_attention_block(query, key, value, params, *, n_heads: int,
                          need_weights: bool = True, compute_dtype=jnp.bfloat16):
    """query: (B, Lq, D); key/value: (B, Lk, D). Returns (output, attn_weights or None)."""
    B, Lq, D = query.shape
    _, Lk, _ = key.shape
    assert D % n_heads == 0
    head_dim = D // n_heads
    if compute_dtype is None:
        compute_dtype = jnp.bfloat16
    cd = compute_dtype

    # Split PyTorch-style in_proj and pre-transpose all weights for (x @ W) matmuls.
    in_w = params["in_proj_weight"]          # (3D, D)
    in_b = params["in_proj_bias"]            # (3D,)
    wq_t = in_w[0 * D:1 * D].T.astype(cd)    # (D, D)
    wo_t = params["out_proj_weight"].T.astype(cd)

    kv_fused = key is value                  # usual encoder-decoder pattern
    if kv_fused:
        wkv_t = jnp.concatenate([in_w[1 * D:2 * D].T, in_w[2 * D:3 * D].T],
                                axis=1).astype(cd)               # (D, 2D)
    else:
        wk_t = in_w[1 * D:2 * D].T.astype(cd)
        wv_t = in_w[2 * D:3 * D].T.astype(cd)

    # Pack the six per-feature vectors into one sublane-aligned (8, D) f32 block.
    zero = jnp.zeros((D,), jnp.float32)
    vecs = jnp.stack([in_b[0 * D:1 * D], in_b[1 * D:2 * D], in_b[2 * D:3 * D],
                      params["out_proj_bias"], params["ln_weight"], params["ln_bias"],
                      zero, zero], axis=0).astype(jnp.float32)

    bt = _pick_block_b(B, Lq, Lk, D, need_weights, query.dtype.itemsize, kv_fused)
    grid = (B // bt,)
    b3 = lambda i: (i, 0, 0)
    r2 = lambda i: (0, 0)

    def _const_spec(shape):
        # Constant-index inputs (weights / packed vectors): single-buffered if supported.
        try:
            return pl.BlockSpec(shape, r2, pipeline_mode=pl.Buffered(1))
        except (TypeError, AttributeError):
            return pl.BlockSpec(shape, r2)

    in_specs = [pl.BlockSpec((bt, Lq, D), b3)]
    args = [query]
    if kv_fused:
        in_specs.append(pl.BlockSpec((bt, Lk, D), b3))
        args.append(key)
        in_specs += [_const_spec((D, D)), _const_spec((D, 2 * D)),
                     _const_spec((D, D)), _const_spec((8, D))]
        args += [wq_t, wkv_t, wo_t, vecs]
    else:
        in_specs += [pl.BlockSpec((bt, Lk, D), b3), pl.BlockSpec((bt, Lk, D), b3)]
        args += [key, value]
        in_specs += [_const_spec((D, D)), _const_spec((D, D)), _const_spec((D, D)),
                     _const_spec((D, D)), _const_spec((8, D))]
        args += [wq_t, wk_t, wv_t, wo_t, vecs]

    # Lane-dense outputs: (B, 1, Lq*D) and (B, 1, Lq*Lk), reshaped back in the wrapper.
    out_specs = [pl.BlockSpec((bt, 1, Lq * D), b3)]
    out_shapes = [jax.ShapeDtypeStruct((B, 1, Lq * D), query.dtype)]
    if need_weights:
        out_specs.append(pl.BlockSpec((bt, 1, Lq * Lk), b3))
        out_shapes.append(jax.ShapeDtypeStruct((B, 1, Lq * Lk), jnp.float32))

    # VMEM: keep the default limit unless the estimated footprint (with headroom) exceeds it.
    need = _vmem_estimate_bytes(bt, Lq, Lk, D, n_heads, need_weights, kv_fused,
                                jnp.dtype(cd).itemsize, query.dtype.itemsize)
    cp_kwargs = dict(dimension_semantics=("parallel",))
    if 2 * need > 32 * 1024 * 1024:
        cap = 64 * 1024 * 1024
        try:
            cap = int(getattr(pltpu.get_tpu_info(), "vmem_capacity_bytes", cap)) or cap
        except Exception:
            pass
        cp_kwargs["vmem_limit_bytes"] = min(2 * need, cap)
    compiler_params = pltpu.CompilerParams(**cp_kwargs)

    kernel = functools.partial(_cross_attn_kernel, n_heads=n_heads, head_dim=head_dim,
                               kv_fused=kv_fused, need_weights=need_weights)
    grid_spec = pltpu.PrefetchScalarGridSpec(
        num_scalar_prefetch=0, grid=grid, in_specs=in_specs, out_specs=tuple(out_specs))

    results = pl.pallas_call(
        kernel, out_shape=tuple(out_shapes), grid_spec=grid_spec,
        compiler_params=compiler_params,
    )(*args)

    out = results[0].reshape(B, Lq, D)
    attw = results[1].reshape(B, Lq, Lk) if need_weights else None
    return out, attw


# ------------------------------------------------------------------------- reference ----
def _reference(query, key, value, params, *, n_heads: int):
    """Pure-JAX reference mirroring PyTorch nn.MultiheadAttention (eval mode)."""
    B, Lq, D = query.shape
    _, Lk, _ = key.shape
    hd = D // n_heads
    in_w, in_b = params["in_proj_weight"], params["in_proj_bias"]
    q = query @ in_w[:D].T + in_b[:D]
    k = key @ in_w[D:2 * D].T + in_b[D:2 * D]
    v = value @ in_w[2 * D:].T + in_b[2 * D:]
    q = q.reshape(B, Lq, n_heads, hd).transpose(0, 2, 1, 3) / math.sqrt(hd)
    k = k.reshape(B, Lk, n_heads, hd).transpose(0, 2, 1, 3)
    v = v.reshape(B, Lk, n_heads, hd).transpose(0, 2, 1, 3)
    s = jnp.einsum("bhqd,bhkd->bhqk", q, k)
    p = jax.nn.softmax(s, axis=-1)
    o = jnp.einsum("bhqk,bhkd->bhqd", p, v).transpose(0, 2, 1, 3).reshape(B, Lq, D)
    attn_out = o @ params["out_proj_weight"].T + params["out_proj_bias"]
    attw = p.mean(axis=1)
    resid = query + attn_out
    mean = resid.mean(-1, keepdims=True)
    var = ((resid - mean) ** 2).mean(-1, keepdims=True)
    out = (resid - mean) / jnp.sqrt(var + 1e-5) * params["ln_weight"] + params["ln_bias"]
    return out, attw


def init_params(key, d_model):
    ks = jax.random.split(key, 6)
    scale = 1.0 / math.sqrt(d_model)
    u = lambda k, shape: jax.random.uniform(k, shape, minval=-scale, maxval=scale,
                                            dtype=jnp.float32)
    return {
        "in_proj_weight": u(ks[0], (3 * d_model, d_model)),
        "in_proj_bias": u(ks[1], (3 * d_model,)),
        "out_proj_weight": u(ks[2], (d_model, d_model)),
        "out_proj_bias": u(ks[3], (d_model,)),
        "ln_weight": 1.0 + 0.1 * u(ks[4], (d_model,)),
        "ln_bias": u(ks[5], (d_model,)),
    }


if __name__ == "__main__":
    B, Lq, Lk, D, H = 2, 8, 8, 32, 4
    key = jax.random.PRNGKey(0)
    kq, kk, kv, kp = jax.random.split(key, 4)
    query = jax.random.normal(kq, (B, Lq, D), dtype=jnp.float32)
    key_t = jax.random.normal(kk, (B, Lk, D), dtype=jnp.float32)
    value = jax.random.normal(kv, (B, Lk, D), dtype=jnp.float32)
    params = init_params(kp, D)
    ref_out, ref_attw = _reference(query, key_t, value, params, n_heads=H)

    # 1) f32 MXU operands, attention weights returned -> tight check vs reference.
    out, attw = cross_attention_block(query, key_t, value, params, n_heads=H,
                                      compute_dtype=jnp.float32)
    jax.block_until_ready((out, attw))
    assert out.shape == (B, Lq, D) and attw.shape == (B, Lq, Lk)
    assert jnp.allclose(out, ref_out, atol=2e-3, rtol=2e-3), \
        float(jnp.max(jnp.abs(out - ref_out)))
    assert jnp.allclose(attw, ref_attw, atol=2e-3, rtol=2e-3), \
        float(jnp.max(jnp.abs(attw - ref_attw)))

    # 2) Default path: bf16 MXU operands, no attention-weights writeback.
    out_bf, none_w = cross_attention_block(query, key_t, value, params, n_heads=H,
                                           need_weights=False)
    jax.block_until_ready(out_bf)
    assert none_w is None
    assert jnp.allclose(out_bf, ref_out, atol=5e-2, rtol=5e-2), \
        float(jnp.max(jnp.abs(out_bf - ref_out)))

    # 3) key-is-value fast path (single fused K/V projection matmul).
    out_kv, attw_kv = cross_attention_block(query, key_t, key_t, params, n_heads=H,
                                            compute_dtype=jnp.float32)
    jax.block_until_ready((out_kv, attw_kv))
    ref_out_kv, ref_attw_kv = _reference(query, key_t, key_t, params, n_heads=H)
    assert jnp.allclose(out_kv, ref_out_kv, atol=2e-3, rtol=2e-3)
    assert jnp.allclose(attw_kv, ref_attw_kv, atol=2e-3, rtol=2e-3)

    # TODO(synk): dropout on attention probs / output is identity here (eval mode);
    # training-mode stochastic dropout would need pltpu.prng_* inside the kernel.
    print("KERNEL_OK")
</pallas_src>

<mosaic_0001>
module attributes {stable_mosaic.version = 11 : i64} {
  func.func @_cross_attn_kernel(%arg0: i32, %arg1: memref<2x8x32xf32, #tpu.memory_space<vmem>>, %arg2: memref<2x8x32xf32, #tpu.memory_space<vmem>>, %arg3: memref<2x8x32xf32, #tpu.memory_space<vmem>>, %arg4: memref<32x32xf32, #tpu.memory_space<vmem>>, %arg5: memref<32x32xf32, #tpu.memory_space<vmem>>, %arg6: memref<32x32xf32, #tpu.memory_space<vmem>>, %arg7: memref<32x32xf32, #tpu.memory_space<vmem>>, %arg8: memref<8x32xf32, #tpu.memory_space<vmem>>, %arg9: memref<2x1x256xf32, #tpu.memory_space<vmem>>, %arg10: memref<2x1x64xf32, #tpu.memory_space<vmem>>) attributes {dimension_semantics = [#tpu.dimension_semantics<parallel>], iteration_bounds = array<i64: 1>, scalar_prefetch = 0 : i64, scratch_operands = 0 : i64, tpu.core_type = #tpu.core_type<tc>, window_params = [{transform_indices = @transform_0, window_bounds = array<i64: 2, 8, 32>}, {transform_indices = @transform_1, window_bounds = array<i64: 2, 8, 32>}, {transform_indices = @transform_2, window_bounds = array<i64: 2, 8, 32>}, {pipeline_mode = #tpu.pipeline_mode<synchronous>, transform_indices = @transform_3, window_bounds = array<i64: 32, 32>}, {pipeline_mode = #tpu.pipeline_mode<synchronous>, transform_indices = @transform_4, window_bounds = array<i64: 32, 32>}, {pipeline_mode = #tpu.pipeline_mode<synchronous>, transform_indices = @transform_5, window_bounds = array<i64: 32, 32>}, {pipeline_mode = #tpu.pipeline_mode<synchronous>, transform_indices = @transform_6, window_bounds = array<i64: 32, 32>}, {pipeline_mode = #tpu.pipeline_mode<synchronous>, transform_indices = @transform_7, window_bounds = array<i64: 8, 32>}, {transform_indices = @transform_8, window_bounds = array<i64: 2, 1, 256>}, {transform_indices = @transform_9, window_bounds = array<i64: 2, 1, 64>}]} {
    %c0 = arith.constant 0 : index
    %c0_0 = arith.constant 0 : index
    %0 = vector.load %arg8[%c0, %c0_0] : memref<8x32xf32, #tpu.memory_space<vmem>>, vector<8x32xf32>
    %1 = vector.extract_strided_slice %0 {offsets = [0, 0], sizes = [1, 32], strides = [1, 1]} : vector<8x32xf32> to vector<1x32xf32>
    %2 = vector.extract_strided_slice %0 {offsets = [1, 0], sizes = [1, 32], strides = [1, 1]} : vector<8x32xf32> to vector<1x32xf32>
    %3 = vector.extract_strided_slice %0 {offsets = [2, 0], sizes = [1, 32], strides = [1, 1]} : vector<8x32xf32> to vector<1x32xf32>
    %4 = vector.extract_strided_slice %0 {offsets = [3, 0], sizes = [1, 32], strides = [1, 1]} : vector<8x32xf32> to vector<1x32xf32>
    %5 = vector.extract_strided_slice %0 {offsets = [4, 0], sizes = [1, 32], strides = [1, 1]} : vector<8x32xf32> to vector<1x32xf32>
    %6 = vector.extract_strided_slice %0 {offsets = [5, 0], sizes = [1, 32], strides = [1, 1]} : vector<8x32xf32> to vector<1x32xf32>
    %c0_1 = arith.constant 0 : index
    %c0_2 = arith.constant 0 : index
    %c0_3 = arith.constant 0 : index
    %7 = vector.load %arg1[%c0_1, %c0_2, %c0_3] : memref<2x8x32xf32, #tpu.memory_space<vmem>>, vector<2x8x32xf32>
    %8 = vector.shape_cast %7 : vector<2x8x32xf32> to vector<16x32xf32>
    %c0_4 = arith.constant 0 : index
    %c0_5 = arith.constant 0 : index
    %9 = vector.load %arg4[%c0_4, %c0_5] : memref<32x32xf32, #tpu.memory_space<vmem>>, vector<32x32xf32>
    %cst = arith.constant dense<0.000000e+00> : vector<16x32xf32>
    %10 = tpu.matmul %8, %9, %cst {dimension_numbers = #tpu.dot_dimension_numbers<[1], [0], [0], [1], [0, 0, 1, 1], [], []>} : vector<16x32xf32>, vector<32x32xf32>, vector<16x32xf32> -> vector<16x32xf32>
    %11 = vector.broadcast %1 : vector<1x32xf32> to vector<16x32xf32>
    %12 = arith.addf %10, %11 : vector<16x32xf32>
    %c0_6 = arith.constant 0 : index
    %c0_7 = arith.constant 0 : index
    %c0_8 = arith.constant 0 : index
    %13 = vector.load %arg2[%c0_6, %c0_7, %c0_8] : memref<2x8x32xf32, #tpu.memory_space<vmem>>, vector<2x8x32xf32>
    %14 = vector.shape_cast %13 : vector<2x8x32xf32> to vector<16x32xf32>
    %c0_9 = arith.constant 0 : index
    %c0_10 = arith.constant 0 : index
    %c0_11 = arith.constant 0 : index
    %15 = vector.load %arg3[%c0_9, %c0_10, %c0_11] : memref<2x8x32xf32, #tpu.memory_space<vmem>>, vector<2x8x32xf32>
    %16 = vector.shape_cast %15 : vector<2x8x32xf32> to vector<16x32xf32>
    %c0_12 = arith.constant 0 : index
    %c0_13 = arith.constant 0 : index
    %17 = vector.load %arg5[%c0_12, %c0_13] : memref<32x32xf32, #tpu.memory_space<vmem>>, vector<32x32xf32>
    %cst_14 = arith.constant dense<0.000000e+00> : vector<16x32xf32>
    %18 = tpu.matmul %14, %17, %cst_14 {dimension_numbers = #tpu.dot_dimension_numbers<[1], [0], [0], [1], [0, 0, 1, 1], [], []>} : vector<16x32xf32>, vector<32x32xf32>, vector<16x32xf32> -> vector<16x32xf32>
    %19 = vector.broadcast %2 : vector<1x32xf32> to vector<16x32xf32>
    %20 = arith.addf %18, %19 : vector<16x32xf32>
    %c0_15 = arith.constant 0 : index
    %c0_16 = arith.constant 0 : index
    %21 = vector.load %arg6[%c0_15, %c0_16] : memref<32x32xf32, #tpu.memory_space<vmem>>, vector<32x32xf32>
    %cst_17 = arith.constant dense<0.000000e+00> : vector<16x32xf32>
    %22 = tpu.matmul %16, %21, %cst_17 {dimension_numbers = #tpu.dot_dimension_numbers<[1], [0], [0], [1], [0, 0, 1, 1], [], []>} : vector<16x32xf32>, vector<32x32xf32>, vector<16x32xf32> -> vector<16x32xf32>
    %23 = vector.broadcast %3 : vector<1x32xf32> to vector<16x32xf32>
    %24 = arith.addf %22, %23 : vector<16x32xf32>
    %cst_18 = arith.constant 0.353553385 : f32
    %25 = vector.broadcast %cst_18 : f32 to vector<16x32xf32>
    %26 = arith.mulf %12, %25 : vector<16x32xf32>
    %27 = vector.shape_cast %26 : vector<16x32xf32> to vector<2x8x32xf32>
    %28 = vector.shape_cast %20 : vector<16x32xf32> to vector<2x8x32xf32>
    %29 = vector.shape_cast %24 : vector<16x32xf32> to vector<2x8x32xf32>
    %30 = vector.extract_strided_slice %27 {offsets = [0, 0, 0], sizes = [2, 8, 8], strides = [1, 1, 1]} : vector<2x8x32xf32> to vector<2x8x8xf32>
    %31 = vector.extract_strided_slice %28 {offsets = [0, 0, 0], sizes = [2, 8, 8], strides = [1, 1, 1]} : vector<2x8x32xf32> to vector<2x8x8xf32>
    %cst_19 = arith.constant dense<0.000000e+00> : vector<2x8x8xf32>
    %32 = tpu.matmul %30, %31, %cst_19 {dimension_numbers = #tpu.dot_dimension_numbers<[2], [2], [1], [1], [0, 0, 0, 1, 1, 1], [0], [0]>} : vector<2x8x8xf32>, vector<2x8x8xf32>, vector<2x8x8xf32> -> vector<2x8x8xf32>
    %33 = vector.extract_strided_slice %27 {offsets = [0, 0, 8], sizes = [2, 8, 8], strides = [1, 1, 1]} : vector<2x8x32xf32> to vector<2x8x8xf32>
    %34 = vector.extract_strided_slice %28 {offsets = [0, 0, 8], sizes = [2, 8, 8], strides = [1, 1, 1]} : vector<2x8x32xf32> to vector<2x8x8xf32>
    %cst_20 = arith.constant dense<0.000000e+00> : vector<2x8x8xf32>
    %35 = tpu.matmul %33, %34, %cst_20 {dimension_numbers = #tpu.dot_dimension_numbers<[2], [2], [1], [1], [0, 0, 0, 1, 1, 1], [0], [0]>} : vector<2x8x8xf32>, vector<2x8x8xf32>, vector<2x8x8xf32> -> vector<2x8x8xf32>
    %36 = vector.extract_strided_slice %27 {offsets = [0, 0, 16], sizes = [2, 8, 8], strides = [1, 1, 1]} : vector<2x8x32xf32> to vector<2x8x8xf32>
    %37 = vector.extract_strided_slice %28 {offsets = [0, 0, 16], sizes = [2, 8, 8], strides = [1, 1, 1]} : vector<2x8x32xf32> to vector<2x8x8xf32>
    %cst_21 = arith.constant dense<0.000000e+00> : vector<2x8x8xf32>
    %38 = tpu.matmul %36, %37, %cst_21 {dimension_numbers = #tpu.dot_dimension_numbers<[2], [2], [1], [1], [0, 0, 0, 1, 1, 1], [0], [0]>} : vector<2x8x8xf32>, vector<2x8x8xf32>, vector<2x8x8xf32> -> vector<2x8x8xf32>
    %39 = vector.extract_strided_slice %27 {offsets = [0, 0, 24], sizes = [2, 8, 8], strides = [1, 1, 1]} : vector<2x8x32xf32> to vector<2x8x8xf32>
    %40 = vector.extract_strided_slice %28 {offsets = [0, 0, 24], sizes = [2, 8, 8], strides = [1, 1, 1]} : vector<2x8x32xf32> to vector<2x8x8xf32>
    %cst_22 = arith.constant dense<0.000000e+00> : vector<2x8x8xf32>
    %41 = tpu.matmul %39, %40, %cst_22 {dimension_numbers = #tpu.dot_dimension_numbers<[2], [2], [1], [1], [0, 0, 0, 1, 1, 1], [0], [0]>} : vector<2x8x8xf32>, vector<2x8x8xf32>, vector<2x8x8xf32> -> vector<2x8x8xf32>
    %42 = tpu.concatenate %32, %35, %38, %41 in 0 : vector<2x8x8xf32>, vector<2x8x8xf32>, vector<2x8x8xf32>, vector<2x8x8xf32> -> vector<8x8x8xf32>
    %cst_23 = arith.constant dense<0xFF800000> : vector<8x8xf32>
    %43 = vector.multi_reduction <maximumf>, %42, %cst_23 [2] : vector<8x8x8xf32> to vector<8x8xf32>
    %44 = vector.shape_cast %43 : vector<8x8xf32> to vector<8x8x1xf32>
    %45 = vector.broadcast %44 : vector<8x8x1xf32> to vector<8x8x8xf32>
    %46 = arith.subf %42, %45 : vector<8x8x8xf32>
    %47 = math.exp %46 : vector<8x8x8xf32>
    %cst_24 = arith.constant dense<0.000000e+00> : vector<8x8xf32>
    %48 = vector.multi_reduction <add>, %47, %cst_24 [2] : vector<8x8x8xf32> to vector<8x8xf32>
    %49 = vector.shape_cast %48 : vector<8x8xf32> to vector<8x8x1xf32>
    %50 = vector.broadcast %49 : vector<8x8x1xf32> to vector<8x8x8xf32>
    %51 = arith.divf %47, %50 : vector<8x8x8xf32>
    %52 = vector.extract_strided_slice %51 {offsets = [0, 0, 0], sizes = [2, 8, 8], strides = [1, 1, 1]} : vector<8x8x8xf32> to vector<2x8x8xf32>
    %53 = vector.extract_strided_slice %29 {offsets = [0, 0, 0], sizes = [2, 8, 8], strides = [1, 1, 1]} : vector<2x8x32xf32> to vector<2x8x8xf32>
    %cst_25 = arith.constant dense<0.000000e+00> : vector<2x8x8xf32>
    %54 = tpu.matmul %52, %53, %cst_25 {dimension_numbers = #tpu.dot_dimension_numbers<[2], [1], [1], [2], [0, 0, 0, 1, 1, 2], [0], [0]>} : vector<2x8x8xf32>, vector<2x8x8xf32>, vector<2x8x8xf32> -> vector<2x8x8xf32>
    %55 = vector.extract_strided_slice %51 {offsets = [2, 0, 0], sizes = [2, 8, 8], strides = [1, 1, 1]} : vector<8x8x8xf32> to vector<2x8x8xf32>
    %56 = vector.extract_strided_slice %29 {offsets = [0, 0, 8], sizes = [2, 8, 8], strides = [1, 1, 1]} : vector<2x8x32xf32> to vector<2x8x8xf32>
    %cst_26 = arith.constant dense<0.000000e+00> : vector<2x8x8xf32>
    %57 = tpu.matmul %55, %56, %cst_26 {dimension_numbers = #tpu.dot_dimension_numbers<[2], [1], [1], [2], [0, 0, 0, 1, 1, 2], [0], [0]>} : vector<2x8x8xf32>, vector<2x8x8xf32>, vector<2x8x8xf32> -> vector<2x8x8xf32>
    %58 = vector.extract_strided_slice %51 {offsets = [4, 0, 0], sizes = [2, 8, 8], strides = [1, 1, 1]} : vector<8x8x8xf32> to vector<2x8x8xf32>
    %59 = vector.extract_strided_slice %29 {offsets = [0, 0, 16], sizes = [2, 8, 8], strides = [1, 1, 1]} : vector<2x8x32xf32> to vector<2x8x8xf32>
    %cst_27 = arith.constant dense<0.000000e+00> : vector<2x8x8xf32>
    %60 = tpu.matmul %58, %59, %cst_27 {dimension_numbers = #tpu.dot_dimension_numbers<[2], [1], [1], [2], [0, 0, 0, 1, 1, 2], [0], [0]>} : vector<2x8x8xf32>, vector<2x8x8xf32>, vector<2x8x8xf32> -> vector<2x8x8xf32>
    %61 = vector.extract_strided_slice %51 {offsets = [6, 0, 0], sizes = [2, 8, 8], strides = [1, 1, 1]} : vector<8x8x8xf32> to vector<2x8x8xf32>
    %62 = vector.extract_strided_slice %29 {offsets = [0, 0, 24], sizes = [2, 8, 8], strides = [1, 1, 1]} : vector<2x8x32xf32> to vector<2x8x8xf32>
    %cst_28 = arith.constant dense<0.000000e+00> : vector<2x8x8xf32>
    %63 = tpu.matmul %61, %62, %cst_28 {dimension_numbers = #tpu.dot_dimension_numbers<[2], [1], [1], [2], [0, 0, 0, 1, 1, 2], [0], [0]>} : vector<2x8x8xf32>, vector<2x8x8xf32>, vector<2x8x8xf32> -> vector<2x8x8xf32>
    %64 = tpu.concatenate %54, %57, %60, %63 in 2 : vector<2x8x8xf32>, vector<2x8x8xf32>, vector<2x8x8xf32>, vector<2x8x8xf32> -> vector<2x8x32xf32>
    %65 = vector.shape_cast %64 : vector<2x8x32xf32> to vector<16x32xf32>
    %c0_29 = arith.constant 0 : index
    %c0_30 = arith.constant 0 : index
    %66 = vector.load %arg7[%c0_29, %c0_30] : memref<32x32xf32, #tpu.memory_space<vmem>>, vector<32x32xf32>
    %cst_31 = arith.constant dense<0.000000e+00> : vector<16x32xf32>
    %67 = tpu.matmul %65, %66, %cst_31 {dimension_numbers = #tpu.dot_dimension_numbers<[1], [0], [0], [1], [0, 0, 1, 1], [], []>} : vector<16x32xf32>, vector<32x32xf32>, vector<16x32xf32> -> vector<16x32xf32>
    %68 = vector.broadcast %4 : vector<1x32xf32> to vector<16x32xf32>
    %69 = arith.addf %67, %68 : vector<16x32xf32>
    %70 = vector.shape_cast %69 : vector<16x32xf32> to vector<2x8x32xf32>
    %71 = arith.addf %7, %70 : vector<2x8x32xf32>
    %cst_32 = arith.constant dense<0.000000e+00> : vector<2x8xf32>
    %72 = vector.multi_reduction <add>, %71, %cst_32 [2] : vector<2x8x32xf32> to vector<2x8xf32>
    %73 = vector.shape_cast %72 : vector<2x8xf32> to vector<2x8x1xf32>
    %cst_33 = arith.constant 3.200000e+01 : f32
    %74 = vector.broadcast %cst_33 : f32 to vector<2x8x1xf32>
    %75 = arith.divf %73, %74 : vector<2x8x1xf32>
    %76 = vector.broadcast %75 : vector<2x8x1xf32> to vector<2x8x32xf32>
    %77 = arith.subf %71, %76 : vector<2x8x32xf32>
    %78 = arith.mulf %77, %77 : vector<2x8x32xf32>
    %cst_34 = arith.constant dense<0.000000e+00> : vector<2x8xf32>
    %79 = vector.multi_reduction <add>, %78, %cst_34 [2] : vector<2x8x32xf32> to vector<2x8xf32>
    %80 = vector.shape_cast %79 : vector<2x8xf32> to vector<2x8x1xf32>
    %cst_35 = arith.constant 3.200000e+01 : f32
    %81 = vector.broadcast %cst_35 : f32 to vector<2x8x1xf32>
    %82 = arith.divf %80, %81 : vector<2x8x1xf32>
    %83 = vector.broadcast %75 : vector<2x8x1xf32> to vector<2x8x32xf32>
    %84 = arith.subf %71, %83 : vector<2x8x32xf32>
    %cst_36 = arith.constant 9.99999974E-6 : f32
    %85 = vector.broadcast %cst_36 : f32 to vector<2x8x1xf32>
    %86 = arith.addf %82, %85 : vector<2x8x1xf32>
    %87 = math.rsqrt %86 : vector<2x8x1xf32>
    %88 = vector.broadcast %87 : vector<2x8x1xf32> to vector<2x8x32xf32>
    %89 = arith.mulf %84, %88 : vector<2x8x32xf32>
    %90 = vector.shape_cast %5 : vector<1x32xf32> to vector<1x1x32xf32>
    %91 = vector.broadcast %90 : vector<1x1x32xf32> to vector<2x8x32xf32>
    %92 = arith.mulf %89, %91 : vector<2x8x32xf32>
    %93 = vector.shape_cast %6 : vector<1x32xf32> to vector<1x1x32xf32>
    %94 = vector.broadcast %93 : vector<1x1x32xf32> to vector<2x8x32xf32>
    %95 = arith.addf %92, %94 : vector<2x8x32xf32>
    %96 = vector.shape_cast %95 : vector<2x8x32xf32> to vector<2x1x256xf32>
    %c0_37 = arith.constant 0 : index
    %c0_38 = arith.constant 0 : index
    %c0_39 = arith.constant 0 : index
    %97 = vector.load %arg9[%c0_37, %c0_38, %c0_39] : memref<2x1x256xf32, #tpu.memory_space<vmem>>, vector<2x1x256xf32>
    tpu.vector_store %arg9[%c0_37, %c0_38, %c0_39], %96 {strides = array<i32>} : memref<2x1x256xf32, #tpu.memory_space<vmem>>, vector<2x1x256xf32>,
    %98 = vector.extract_strided_slice %51 {offsets = [0, 0, 0], sizes = [2, 8, 8], strides = [1, 1, 1]} : vector<8x8x8xf32> to vector<2x8x8xf32>
    %99 = vector.extract_strided_slice %51 {offsets = [2, 0, 0], sizes = [2, 8, 8], strides = [1, 1, 1]} : vector<8x8x8xf32> to vector<2x8x8xf32>
    %100 = arith.addf %98, %99 : vector<2x8x8xf32>
    %101 = vector.extract_strided_slice %51 {offsets = [4, 0, 0], sizes = [2, 8, 8], strides = [1, 1, 1]} : vector<8x8x8xf32> to vector<2x8x8xf32>
    %102 = arith.addf %100, %101 : vector<2x8x8xf32>
    %103 = vector.extract_strided_slice %51 {offsets = [6, 0, 0], sizes = [2, 8, 8], strides = [1, 1, 1]} : vector<8x8x8xf32> to vector<2x8x8xf32>
    %104 = arith.addf %102, %103 : vector<2x8x8xf32>
    %cst_40 = arith.constant 2.500000e-01 : f32
    %105 = vector.broadcast %cst_40 : f32 to vector<2x8x8xf32>
    %106 = arith.mulf %104, %105 : vector<2x8x8xf32>
    %107 = vector.shape_cast %106 : vector<2x8x8xf32> to vector<2x1x64xf32>
    %c0_41 = arith.constant 0 : index
    %c0_42 = arith.constant 0 : index
    %c0_43 = arith.constant 0 : index
    %108 = vector.load %arg10[%c0_41, %c0_42, %c0_43] : memref<2x1x64xf32, #tpu.memory_space<vmem>>, vector<2x1x64xf32>
    tpu.vector_store %arg10[%c0_41, %c0_42, %c0_43], %107 {strides = array<i32>} : memref<2x1x64xf32, #tpu.memory_space<vmem>>, vector<2x1x64xf32>,
    return
  }
  func.func @transform_0(%arg0: i32) -> (i32, i32, i32) {
    %c0_i32 = arith.constant 0 : i32
    %c0_i32_0 = arith.constant 0 : i32
    %c0_i32_1 = arith.constant 0 : i32
    return %arg0, %c0_i32, %c0_i32_0 : i32, i32, i32
  }
  func.func @transform_1(%arg0: i32) -> (i32, i32, i32) {
    %c0_i32 = arith.constant 0 : i32
    %c0_i32_0 = arith.constant 0 : i32
    %c0_i32_1 = arith.constant 0 : i32
    return %arg0, %c0_i32, %c0_i32_0 : i32, i32, i32
  }
  func.func @transform_2(%arg0: i32) -> (i32, i32, i32) {
    %c0_i32 = arith.constant 0 : i32
    %c0_i32_0 = arith.constant 0 : i32
    %c0_i32_1 = arith.constant 0 : i32
    return %arg0, %c0_i32, %c0_i32_0 : i32, i32, i32
  }
  func.func @transform_3(%arg0: i32) -> (i32, i32) {
    %c0_i32 = arith.constant 0 : i32
    %c0_i32_0 = arith.constant 0 : i32
    %c0_i32_1 = arith.constant 0 : i32
    return %c0_i32, %c0_i32_0 : i32, i32
  }
  func.func @transform_4(%arg0: i32) -> (i32, i32) {
    %c0_i32 = arith.constant 0 : i32
    %c0_i32_0 = arith.constant 0 : i32
    %c0_i32_1 = arith.constant 0 : i32
    return %c0_i32, %c0_i32_0 : i32, i32
  }
  func.func @transform_5(%arg0: i32) -> (i32, i32) {
    %c0_i32 = arith.constant 0 : i32
    %c0_i32_0 = arith.constant 0 : i32
    %c0_i32_1 = arith.constant 0 : i32
    return %c0_i32, %c0_i32_0 : i32, i32
  }
  func.func @transform_6(%arg0: i32) -> (i32, i32) {
    %c0_i32 = arith.constant 0 : i32
    %c0_i32_0 = arith.constant 0 : i32
    %c0_i32_1 = arith.constant 0 : i32
    return %c0_i32, %c0_i32_0 : i32, i32
  }
  func.func @transform_7(%arg0: i32) -> (i32, i32) {
    %c0_i32 = arith.constant 0 : i32
    %c0_i32_0 = arith.constant 0 : i32
    %c0_i32_1 = arith.constant 0 : i32
    return %c0_i32, %c0_i32_0 : i32, i32
  }
  func.func @transform_8(%arg0: i32) -> (i32, i32, i32) {
    %c0_i32 = arith.constant 0 : i32
    %c0_i32_0 = arith.constant 0 : i32
    %c0_i32_1 = arith.constant 0 : i32
    return %arg0, %c0_i32, %c0_i32_0 : i32, i32, i32
  }
  func.func @transform_9(%arg0: i32) -> (i32, i32, i32) {
    %c0_i32 = arith.constant 0 : i32
    %c0_i32_0 = arith.constant 0 : i32
    %c0_i32_1 = arith.constant 0 : i32
    return %arg0, %c0_i32, %c0_i32_0 : i32, i32, i32
  }
}

</mosaic_0001>

<llo_original>
// kernel: tpu_custom_call.1
$region0: #{tpu_custom_call.1}
  #allocation0 [shape = 'u32[]', space=smem, size = 0x4, offset = 0x4, fixed_abs, tag = 'smem constant byte address 0x4 - core index']
  #allocation1 [shape = 'u32[144,128]{1,0:T(1,128)}', space=vmem, size = 0x12000, scoped, tag = 'internal scratch']
  %s0 = inlined_call_operand.hbm [shape: f32[2,8,32], index: 0, kind: input, shape index: {}]
  %s1 = inlined_call_operand.hbm [shape: f32[2,8,32], index: 1, kind: input, shape index: {}]
  %s2 = inlined_call_operand.hbm [shape: f32[2,8,32], index: 2, kind: input, shape index: {}]
  %s3 = inlined_call_operand.hbm [shape: f32[32,32], index: 3, kind: input, shape index: {}]
  %s4 = inlined_call_operand.hbm [shape: f32[32,32], index: 4, kind: input, shape index: {}]
  %s5 = inlined_call_operand.hbm [shape: f32[32,32], index: 5, kind: input, shape index: {}]
  %s6 = inlined_call_operand.hbm [shape: f32[32,32], index: 6, kind: input, shape index: {}]
  %s7 = inlined_call_operand.vmem [shape: f32[8,32], index: 7, kind: input, shape index: {}]
  %s8 = inlined_call_operand.hbm [shape: f32[2,1,256], index: 8, kind: output, shape index: {0}]
  %s9 = inlined_call_operand.hbm [shape: f32[2,1,64], index: 9, kind: output, shape index: {1}]
  %10 = xla_tuple %s8, %s9
  %s11 = sld [smem:[#allocation0]]
  $region78: #{tpu_custom_call.1} parent=0
    _
  %s13 = ssub.s32 1, %s11
  %s14 = scalar_select 0, %s13, %s11
  $region1: #{tpu_custom_call.1} parent=0
    #allocation2 [shape = 'u8[8192]{0}', space=vmem, size = 0x2000, scoped, tag = 'input window, operand 0, single buffered']
    #allocation3 [shape = 's32[1]{0}', space=sflag, size = 0x4, scoped, tag = 'scoped memory for tpu_custom_call.1']
    #allocation4 [shape = 's32[1]{0}', space=sflag, size = 0x4, scoped, tag = 'scoped memory for tpu_custom_call.1']
    #allocation5 [shape = 'u8[8192]{0}', space=vmem, size = 0x2000, scoped, tag = 'input window, operand 1, single buffered']
    #allocation6 [shape = 's32[1]{0}', space=sflag, size = 0x4, scoped, tag = 'scoped memory for tpu_custom_call.1']
    #allocation7 [shape = 'u8[8192]{0}', space=vmem, size = 0x2000, scoped, tag = 'input window, operand 2, single buffered']
    #allocation8 [shape = 'u8[16384]{0}', space=vmem, size = 0x4000, scoped, tag = 'input window, operand 3, single buffered']
    #allocation9 [shape = 's32[1]{0}', space=sflag, size = 0x4, scoped, tag = 'scoped memory for tpu_custom_call.1']
    #allocation10 [shape = 'u8[16384]{0}', space=vmem, size = 0x4000, scoped, tag = 'input window, operand 4, single buffered']
    #allocation11 [shape = 'u8[16384]{0}', space=vmem, size = 0x4000, scoped, tag = 'input window, operand 5, single buffered']
    #allocation12 [shape = 's32[1]{0}', space=sflag, size = 0x4, scoped, tag = 'scoped memory for tpu_custom_call.1']
    #allocation13 [shape = 'u8[16384]{0}', space=vmem, size = 0x4000, scoped, tag = 'input window, operand 6, single buffered']
    #allocation14 [shape = 'u8[2048]{0}', space=vmem, size = 0x800, scoped, tag = 'output window, operand 0, single buffered']
    #allocation15 [shape = 'u8[1024]{0}', space=vmem, size = 0x400, scoped, tag = 'output window, operand 1, single buffered']
    #allocation16 [shape = 's32[1]{0}', space=sflag, size = 0x4, scoped, tag = 'scoped memory for tpu_custom_call.1']
    %15 = vsyncpa [#allocation3], 0
    %16 = vsyncpa [#allocation6], 0
    %17 = vsyncpa [#allocation9], 0
    %18 = vsyncpa [#allocation12], 0
    %19 = vsyncpa [#allocation4], 0
    %20 = vsyncpa [#allocation16], 0
    // Predicated region
    $region2: #{tpu_custom_call.1} parent=1 // pred_check
      _
    $region3: #{tpu_custom_call.1} parent=1 // pred_check_branch
      %22 = sbr.rel (0) target = $region5
    $region4: #{tpu_custom_call.1} parent=1 // pred_region
      %s24 = ssub.s32 256, 256
      %25 = vsyncadd [#allocation3], %s24
      %s26 = sshll.u32 [#allocation2], 4
      %s27 = int_to_ptr.vmem [resolvable:$true] %s26
      %32 = dma.hbm_to_vmem [thread:$0]  %s0, 256, %s27, [#allocation3], 128, 128, 8
    $region5: #{tpu_custom_call.1} parent=1 // pred_fallthru
      _
    // Predicated region
    $region6: #{tpu_custom_call.1} parent=1 // pred_check
      _
    $region7: #{tpu_custom_call.1} parent=1 // pred_check_branch
      %34 = sbr.rel (0) target = $region9
    $region8: #{tpu_custom_call.1} parent=1 // pred_region
      %s36 = ssub.s32 256, 256
      %37 = vsyncadd [#allocation6], %s36
      %s38 = sshll.u32 [#allocation5], 4
      %s39 = int_to_ptr.vmem [resolvable:$true] %s38
      %44 = dma.hbm_to_vmem [thread:$0]  %s1, 256, %s39, [#allocation6], 128, 128, 8
    $region9: #{tpu_custom_call.1} parent=1 // pred_fallthru
      _
    // Predicated region
    $region10: #{tpu_custom_call.1} parent=1 // pred_check
      _
    $region11: #{tpu_custom_call.1} parent=1 // pred_check_branch
      %46 = sbr.rel (0) target = $region13
    $region12: #{tpu_custom_call.1} parent=1 // pred_region
      %s48 = ssub.s32 256, 256
      %49 = vsyncadd [#allocation6], %s48
      %s50 = sshll.u32 [#allocation7], 4
      %s51 = int_to_ptr.vmem [resolvable:$true] %s50
      %56 = dma.hbm_to_vmem [thread:$0]  %s2, 256, %s51, [#allocation6], 128, 128, 8
    $region13: #{tpu_custom_call.1} parent=1 // pred_fallthru
      _
    // Predicated region
    $region14: #{tpu_custom_call.1} parent=1 // pred_check
      _
    $region15: #{tpu_custom_call.1} parent=1 // pred_check_branch
      %58 = sbr.rel (0) target = $region17
    $region16: #{tpu_custom_call.1} parent=1 // pred_region
      %s60 = ssub.s32 512, 512
      %61 = vsyncadd [#allocation9], %s60
      %s62 = sshll.u32 [#allocation8], 4
      %s63 = int_to_ptr.vmem [resolvable:$true] %s62
      %68 = dma.hbm_to_vmem [thread:$0]  %s3, 512, %s63, [#allocation9], 128, 128, 8
    $region17: #{tpu_custom_call.1} parent=1 // pred_fallthru
      _
    // Predicated region
    $region18: #{tpu_custom_call.1} parent=1 // pred_check
      _
    $region19: #{tpu_custom_call.1} parent=1 // pred_check_branch
      %70 = sbr.rel (0) target = $region21
    $region20: #{tpu_custom_call.1} parent=1 // pred_region
      %s72 = ssub.s32 512, 512
      %73 = vsyncadd [#allocation9], %s72
      %s74 = sshll.u32 [#allocation10], 4
      %s75 = int_to_ptr.vmem [resolvable:$true] %s74
      %80 = dma.hbm_to_vmem [thread:$0]  %s4, 512, %s75, [#allocation9], 128, 128, 8
    $region21: #{tpu_custom_call.1} parent=1 // pred_fallthru
      _
    // Predicated region
    $region22: #{tpu_custom_call.1} parent=1 // pred_check
      _
    $region23: #{tpu_custom_call.1} parent=1 // pred_check_branch
      %82 = sbr.rel (0) target = $region25
    $region24: #{tpu_custom_call.1} parent=1 // pred_region
      %s84 = ssub.s32 512, 512
      %85 = vsyncadd [#allocation12], %s84
      %s86 = sshll.u32 [#allocation11], 4
      %s87 = int_to_ptr.vmem [resolvable:$true] %s86
      %92 = dma.hbm_to_vmem [thread:$0]  %s5, 512, %s87, [#allocation12], 128, 128, 8
    $region25: #{tpu_custom_call.1} parent=1 // pred_fallthru
      _
    // Predicated region
    $region26: #{tpu_custom_call.1} parent=1 // pred_check
      _
    $region27: #{tpu_custom_call.1} parent=1 // pred_check_branch
      %94 = sbr.rel (0) target = $region29
    $region28: #{tpu_custom_call.1} parent=1 // pred_region
      %s96 = ssub.s32 512, 512
      %97 = vsyncadd [#allocation12], %s96
      %s98 = sshll.u32 [#allocation13], 4
      %s99 = int_to_ptr.vmem [resolvable:$true] %s98
      %104 = dma.hbm_to_vmem [thread:$0]  %s6, 512, %s99, [#allocation12], 128, 128, 8
    $region29: #{tpu_custom_call.1} parent=1 // pred_fallthru
      _
    // Predicated region
    $region30: #{tpu_custom_call.1} parent=1 // pred_check
      _
    $region31: #{tpu_custom_call.1} parent=1 // pred_check_branch
      %106 = sbr.rel (0) target = $region33
    $region32: #{tpu_custom_call.1} parent=1 // pred_region
      _
    $region33: #{tpu_custom_call.1} parent=1 // pred_fallthru
      _
    // Predicated region
    $region34: #{tpu_custom_call.1} parent=1 // pred_check
      _
    $region35: #{tpu_custom_call.1} parent=1 // pred_check_branch
      %108 = sbr.rel (0) target = $region37
    $region36: #{tpu_custom_call.1} parent=1 // pred_region
      %109 = dma.done [#allocation3], 256
    $region37: #{tpu_custom_call.1} parent=1 // pred_fallthru
      _
    // Predicated region
    $region38: #{tpu_custom_call.1} parent=1 // pred_check
      _
    $region39: #{tpu_custom_call.1} parent=1 // pred_check_branch
      %111 = sbr.rel (0) target = $region41
    $region40: #{tpu_custom_call.1} parent=1 // pred_region
      %112 = dma.done [#allocation6], 256
    $region41: #{tpu_custom_call.1} parent=1 // pred_fallthru
      _
    // Predicated region
    $region42: #{tpu_custom_call.1} parent=1 // pred_check
      _
    $region43: #{tpu_custom_call.1} parent=1 // pred_check_branch
      %114 = sbr.rel (0) target = $region45
    $region44: #{tpu_custom_call.1} parent=1 // pred_region
      %115 = dma.done [#allocation6], 256
    $region45: #{tpu_custom_call.1} parent=1 // pred_fallthru
      _
    // Predicated region
    $region46: #{tpu_custom_call.1} parent=1 // pred_check
      _
    $region47: #{tpu_custom_call.1} parent=1 // pred_check_branch
      %117 = sbr.rel (0) target = $region49
    $region48: #{tpu_custom_call.1} parent=1 // pred_region
      %118 = dma.done [#allocation9], 512
    $region49: #{tpu_custom_call.1} parent=1 // pred_fallthru
      _
    // Predicated region
    $region50: #{tpu_custom_call.1} parent=1 // pred_check
      _
    $region51: #{tpu_custom_call.1} parent=1 // pred_check_branch
      %120 = sbr.rel (0) target = $region53
    $region52: #{tpu_custom_call.1} parent=1 // pred_region
      %121 = dma.done [#allocation9], 512
    $region53: #{tpu_custom_call.1} parent=1 // pred_fallthru
      _
    // Predicated region
    $region54: #{tpu_custom_call.1} parent=1 // pred_check
      _
    $region55: #{tpu_custom_call.1} parent=1 // pred_check_branch
      %123 = sbr.rel (0) target = $region57
    $region56: #{tpu_custom_call.1} parent=1 // pred_region
      %124 = dma.done [#allocation12], 512
    $region57: #{tpu_custom_call.1} parent=1 // pred_fallthru
      _
    // Predicated region
    $region58: #{tpu_custom_call.1} parent=1 // pred_check
      _
    $region59: #{tpu_custom_call.1} parent=1 // pred_check_branch
      %126 = sbr.rel (0) target = $region61
    $region60: #{tpu_custom_call.1} parent=1 // pred_region
      %127 = dma.done [#allocation12], 512
    $region61: #{tpu_custom_call.1} parent=1 // pred_fallthru
      _
    %v128 = vld [vmem:[%s7] sm:$0xff]
    %v129 = vld [vmem:[#allocation2] sm:$0xff]
    %v130 = vld [vmem:[#allocation2 + $0x8] sm:$0xff]
    %v131 = vld [vmem:[#allocation8] sm:$0xff]
    %v132 = vld [vmem:[#allocation8 + $0x8] sm:$0xff]
    %v133 = vld [vmem:[#allocation8 + $0x10] sm:$0xff]
    %v134 = vld [vmem:[#allocation8 + $0x18] sm:$0xff]
    %v135 = vlaneseq
    %v136 = vshrl.u32 %v135, 7
    %v137 = vsub.s32 0, %v136
    %v138 = vrot.slane %v128, %v137
    %vm139 = vcmask 261120
    %v141 = vsel %vm139, %v129, 0
    %v144 = vsel %vm139, %v130, 0
    %146 = vmatprep.subr.mxu0 0.0
    %147 = vmatpush1.msra.mxu0 0.0
    %148 = vmatprep.subr.mxu0 0.0
    %149 = vmatpush1.msra.mxu0 0.0
    %150 = vmatprep.subr.mxu0 0.0
    %151 = vmatpush1.msra.mxu0 0.0
    %152 = vmatprep.subr.mxu0 0.0
    %153 = vmatpush1.msra.mxu0 0.0
    %154 = vmatprep.subr.mxu0 0.0
    %155 = vmatpush1.msra.mxu0 0.0
    %156 = vmatprep.subr.mxu0 0.0
    %157 = vmatpush1.msra.mxu0 0.0
    %158 = vmatprep.subr.mxu0 0.0
    %159 = vmatpush1.msra.mxu0 0.0
    %160 = vmatprep.subr.mxu0 0.0
    %161 = vmatpush1.msra.mxu0 0.0
    %162 = vmatprep.subr.mxu0 0.0
    %163 = vmatpush1.msra.mxu0 0.0
    %164 = vmatprep.subr.mxu0 0.0
    %165 = vmatpush1.msra.mxu0 0.0
    %166 = vmatprep.subr.mxu0 0.0
    %167 = vmatpush1.msra.mxu0 0.0
    %168 = vmatprep.subr.mxu0 0.0
    %169 = vmatpush1.msra.mxu0 0.0
    %170 = vmatprep.subr.mxu0 0.0
    %171 = vmatpush1.msra.mxu0 %v134
    %172 = vmatprep.subr.mxu0 0.0
    %173 = vmatpush1.msra.mxu0 %v133
    %174 = vmatprep.subr.mxu0 0.0
    %175 = vmatpush1.msra.mxu0 %v132
    %176 = vmatprep.subr.mxu0 0.0
    %177 = vmatpush1.msra.mxu0 %v131
    %178 = vmatprep.subr.mxu0 0.0
    %179 = vmatpush2.msra.mxu0 0.0
    %180 = vmatprep.subr.mxu0 0.0
    %181 = vmatpush2.msra.mxu0 0.0
    %182 = vmatprep.subr.mxu0 0.0
    %183 = vmatpush2.msra.mxu0 0.0
    %184 = vmatprep.subr.mxu0 0.0
    %185 = vmatpush2.msra.mxu0 0.0
    %186 = vmatprep.subr.mxu0 0.0
    %187 = vmatpush2.msra.mxu0 0.0
    %188 = vmatprep.subr.mxu0 0.0
    %189 = vmatpush2.msra.mxu0 0.0
    %190 = vmatprep.subr.mxu0 0.0
    %191 = vmatpush2.msra.mxu0 0.0
    %192 = vmatprep.subr.mxu0 0.0
    %193 = vmatpush2.msra.mxu0 0.0
    %194 = vmatprep.subr.mxu0 0.0
    %195 = vmatpush2.msra.mxu0 0.0
    %196 = vmatprep.subr.mxu0 0.0
    %197 = vmatpush2.msra.mxu0 0.0
    %198 = vmatprep.subr.mxu0 0.0
    %199 = vmatpush2.msra.mxu0 0.0
    %200 = vmatprep.subr.mxu0 0.0
    %201 = vmatpush2.msra.mxu0 0.0
    %202 = vmatprep.subr.mxu0 0.0
    %203 = vmatpush2.msra.mxu0 0.0
    %204 = vmatprep.subr.mxu0 0.0
    %205 = vmatpush2.msra.mxu0 0.0
    %206 = vmatprep.subr.mxu0 0.0
    %207 = vmatpush2.msra.mxu0 0.0
    %208 = vmatprep.subr.mxu0 0.0
    %209 = vmatpush2.msra.mxu0 0.0
    %210 = vmatprep.mubr.f32.mxu0 0.0
    %211 = vmatmul.mubr.f32.gmra.mxu0 %v141
    %v212 = vpop.f32.mrf.mxu0
    %v213 = vadd.f32 %v138, %v212
    %v214 = vpop.f32.mrf.mxu0
    %215 = vmatprep.mubr.f32.mxu0 0.0
    %216 = vmatmul.mubr.f32.gmra.mxu0 %v144
    %v217 = vpop.f32.mrf.mxu0
    %v218 = vadd.f32 %v138, %v217
    %v219 = vpop.f32.mrf.mxu0
    %220 = vdwg.mxu0
    %v221 = vld [vmem:[#allocation5] sm:$0xff]
    %v222 = vld [vmem:[#allocation5 + $0x8] sm:$0xff]
    %v223 = vld [vmem:[#allocation7] sm:$0xff]
    %v224 = vld [vmem:[#allocation7 + $0x8] sm:$0xff]
    %v225 = vld [vmem:[#allocation10] sm:$0xff]
    %v226 = vld [vmem:[#allocation10 + $0x8] sm:$0xff]
    %v227 = vld [vmem:[#allocation10 + $0x10] sm:$0xff]
    %v228 = vld [vmem:[#allocation10 + $0x18] sm:$0xff]
    %v229 = vlaneseq
    %v230 = vshrl.u32 %v229, 7
    %v231 = vsub.s32 1, %v230
    %v232 = vrot.slane %v128, %v231
    %v234 = vsel %vm139, %v221, 0
    %v237 = vsel %vm139, %v222, 0
    %239 = vmatprep.subr.mxu0 0.0
    %240 = vmatpush1.msra.mxu0 0.0
    %241 = vmatprep.subr.mxu0 0.0
    %242 = vmatpush1.msra.mxu0 0.0
    %243 = vmatprep.subr.mxu0 0.0
    %244 = vmatpush1.msra.mxu0 0.0
    %245 = vmatprep.subr.mxu0 0.0
    %246 = vmatpush1.msra.mxu0 0.0
    %247 = vmatprep.subr.mxu0 0.0
    %248 = vmatpush1.msra.mxu0 0.0
    %249 = vmatprep.subr.mxu0 0.0
    %250 = vmatpush1.msra.mxu0 0.0
    %251 = vmatprep.subr.mxu0 0.0
    %252 = vmatpush1.msra.mxu0 0.0
    %253 = vmatprep.subr.mxu0 0.0
    %254 = vmatpush1.msra.mxu0 0.0
    %255 = vmatprep.subr.mxu0 0.0
    %256 = vmatpush1.msra.mxu0 0.0
    %257 = vmatprep.subr.mxu0 0.0
    %258 = vmatpush1.msra.mxu0 0.0
    %259 = vmatprep.subr.mxu0 0.0
    %260 = vmatpush1.msra.mxu0 0.0
    %261 = vmatprep.subr.mxu0 0.0
    %262 = vmatpush1.msra.mxu0 0.0
    %263 = vmatprep.subr.mxu0 0.0
    %264 = vmatpush1.msra.mxu0 %v228
    %265 = vmatprep.subr.mxu0 0.0
    %266 = vmatpush1.msra.mxu0 %v227
    %267 = vmatprep.subr.mxu0 0.0
    %268 = vmatpush1.msra.mxu0 %v226
    %269 = vmatprep.subr.mxu0 0.0
    %270 = vmatpush1.msra.mxu0 %v225
    %271 = vmatprep.subr.mxu0 0.0
    %272 = vmatpush2.msra.mxu0 0.0
    %273 = vmatprep.subr.mxu0 0.0
    %274 = vmatpush2.msra.mxu0 0.0
    %275 = vmatprep.subr.mxu0 0.0
    %276 = vmatpush2.msra.mxu0 0.0
    %277 = vmatprep.subr.mxu0 0.0
    %278 = vmatpush2.msra.mxu0 0.0
    %279 = vmatprep.subr.mxu0 0.0
    %280 = vmatpush2.msra.mxu0 0.0
    %281 = vmatprep.subr.mxu0 0.0
    %282 = vmatpush2.msra.mxu0 0.0
    %283 = vmatprep.subr.mxu0 0.0
    %284 = vmatpush2.msra.mxu0 0.0
    %285 = vmatprep.subr.mxu0 0.0
    %286 = vmatpush2.msra.mxu0 0.0
    %287 = vmatprep.subr.mxu0 0.0
    %288 = vmatpush2.msra.mxu0 0.0
    %289 = vmatprep.subr.mxu0 0.0
    %290 = vmatpush2.msra.mxu0 0.0
    %291 = vmatprep.subr.mxu0 0.0
    %292 = vmatpush2.msra.mxu0 0.0
    %293 = vmatprep.subr.mxu0 0.0
    %294 = vmatpush2.msra.mxu0 0.0
    %295 = vmatprep.subr.mxu0 0.0
    %296 = vmatpush2.msra.mxu0 0.0
    %297 = vmatprep.subr.mxu0 0.0
    %298 = vmatpush2.msra.mxu0 0.0
    %299 = vmatprep.subr.mxu0 0.0
    %300 = vmatpush2.msra.mxu0 0.0
    %301 = vmatprep.subr.mxu0 0.0
    %302 = vmatpush2.msra.mxu0 0.0
    %303 = vmatprep.mubr.f32.mxu0 0.0
    %304 = vmatmul.mubr.f32.gmra.mxu0 %v234
    %v305 = vpop.f32.mrf.mxu0
    %v306 = vadd.f32 %v232, %v305
    %v307 = vpop.f32.mrf.mxu0
    %308 = vmatprep.mubr.f32.mxu0 0.0
    %309 = vmatmul.mubr.f32.gmra.mxu0 %v237
    %v310 = vpop.f32.mrf.mxu0
    %v311 = vadd.f32 %v232, %v310
    %v312 = vpop.f32.mrf.mxu0
    %313 = vdwg.mxu0
    %v314 = vld [vmem:[#allocation11] sm:$0xff]
    %v315 = vld [vmem:[#allocation11 + $0x8] sm:$0xff]
    %v316 = vld [vmem:[#allocation11 + $0x10] sm:$0xff]
    %v317 = vld [vmem:[#allocation11 + $0x18] sm:$0xff]
    %v318 = vlaneseq
    %v319 = vshrl.u32 %v318, 7
    %v320 = vsub.s32 2, %v319
    %v321 = vrot.slane %v128, %v320
    %v323 = vsel %vm139, %v223, 0
    %v326 = vsel %vm139, %v224, 0
    %328 = vmatprep.subr.mxu0 0.0
    %329 = vmatpush1.msra.mxu0 0.0
    %330 = vmatprep.subr.mxu0 0.0
    %331 = vmatpush1.msra.mxu0 0.0
    %332 = vmatprep.subr.mxu0 0.0
    %333 = vmatpush1.msra.mxu0 0.0
    %334 = vmatprep.subr.mxu0 0.0
    %335 = vmatpush1.msra.mxu0 0.0
    %336 = vmatprep.subr.mxu0 0.0
    %337 = vmatpush1.msra.mxu0 0.0
    %338 = vmatprep.subr.mxu0 0.0
    %339 = vmatpush1.msra.mxu0 0.0
    %340 = vmatprep.subr.mxu0 0.0
    %341 = vmatpush1.msra.mxu0 0.0
    %342 = vmatprep.subr.mxu0 0.0
    %343 = vmatpush1.msra.mxu0 0.0
    %344 = vmatprep.subr.mxu0 0.0
    %345 = vmatpush1.msra.mxu0 0.0
    %346 = vmatprep.subr.mxu0 0.0
    %347 = vmatpush1.msra.mxu0 0.0
    %348 = vmatprep.subr.mxu0 0.0
    %349 = vmatpush1.msra.mxu0 0.0
    %350 = vmatprep.subr.mxu0 0.0
    %351 = vmatpush1.msra.mxu0 0.0
    %352 = vmatprep.subr.mxu0 0.0
    %353 = vmatpush1.msra.mxu0 %v317
    %354 = vmatprep.subr.mxu0 0.0
    %355 = vmatpush1.msra.mxu0 %v316
    %356 = vmatprep.subr.mxu0 0.0
    %357 = vmatpush1.msra.mxu0 %v315
    %358 = vmatprep.subr.mxu0 0.0
    %359 = vmatpush1.msra.mxu0 %v314
    %360 = vmatprep.subr.mxu0 0.0
    %361 = vmatpush2.msra.mxu0 0.0
    %362 = vmatprep.subr.mxu0 0.0
    %363 = vmatpush2.msra.mxu0 0.0
    %364 = vmatprep.subr.mxu0 0.0
    %365 = vmatpush2.msra.mxu0 0.0
    %366 = vmatprep.subr.mxu0 0.0
    %367 = vmatpush2.msra.mxu0 0.0
    %368 = vmatprep.subr.mxu0 0.0
    %369 = vmatpush2.msra.mxu0 0.0
    %370 = vmatprep.subr.mxu0 0.0
    %371 = vmatpush2.msra.mxu0 0.0
    %372 = vmatprep.subr.mxu0 0.0
    %373 = vmatpush2.msra.mxu0 0.0
    %374 = vmatprep.subr.mxu0 0.0
    %375 = vmatpush2.msra.mxu0 0.0
    %376 = vmatprep.subr.mxu0 0.0
    %377 = vmatpush2.msra.mxu0 0.0
    %378 = vmatprep.subr.mxu0 0.0
    %379 = vmatpush2.msra.mxu0 0.0
    %380 = vmatprep.subr.mxu0 0.0
    %381 = vmatpush2.msra.mxu0 0.0
    %382 = vmatprep.subr.mxu0 0.0
    %383 = vmatpush2.msra.mxu0 0.0
    %384 = vmatprep.subr.mxu0 0.0
    %385 = vmatpush2.msra.mxu0 0.0
    %386 = vmatprep.subr.mxu0 0.0
    %387 = vmatpush2.msra.mxu0 0.0
    %388 = vmatprep.subr.mxu0 0.0
    %389 = vmatpush2.msra.mxu0 0.0
    %390 = vmatprep.subr.mxu0 0.0
    %391 = vmatpush2.msra.mxu0 0.0
    %392 = vmatprep.mubr.f32.mxu0 0.0
    %393 = vmatmul.mubr.f32.gmra.mxu0 %v323
    %v394 = vpop.f32.mrf.mxu0
    %v395 = vadd.f32 %v321, %v394
    %v396 = vpop.f32.mrf.mxu0
    %397 = vmatprep.mubr.f32.mxu0 0.0
    %398 = vmatmul.mubr.f32.gmra.mxu0 %v326
    %v399 = vpop.f32.mrf.mxu0
    %v400 = vadd.f32 %v321, %v399
    %v401 = vpop.f32.mrf.mxu0
    %402 = vdwg.mxu0
    %v403 = vmul.f32 %v213, 0.35355338
    %v404 = vmul.f32 %v218, 0.35355338
    %vm405 = vcmask 64512
    %v407 = vsel %vm405, %v403, 0
    %v410 = vsel %vm405, %v306, 0
    %412 = vmatprep.subr.mxu0 0.0
    %413 = vmatpush1.xpose.msra.mxu0 0.0
    %414 = vmatprep.subr.mxu0 0.0
    %415 = vmatpush1.xpose.msra.mxu0 0.0
    %416 = vmatprep.subr.mxu0 0.0
    %417 = vmatpush1.xpose.msra.mxu0 0.0
    %418 = vmatprep.subr.mxu0 0.0
    %419 = vmatpush1.xpose.msra.mxu0 0.0
    %420 = vmatprep.subr.mxu0 0.0
    %421 = vmatpush1.xpose.msra.mxu0 0.0
    %422 = vmatprep.subr.mxu0 0.0
    %423 = vmatpush1.xpose.msra.mxu0 0.0
    %424 = vmatprep.subr.mxu0 0.0
    %425 = vmatpush1.xpose.msra.mxu0 0.0
    %426 = vmatprep.subr.mxu0 0.0
    %427 = vmatpush1.xpose.msra.mxu0 0.0
    %428 = vmatprep.subr.mxu0 0.0
    %429 = vmatpush1.xpose.msra.mxu0 0.0
    %430 = vmatprep.subr.mxu0 0.0
    %431 = vmatpush1.xpose.msra.mxu0 0.0
    %432 = vmatprep.subr.mxu0 0.0
    %433 = vmatpush1.xpose.msra.mxu0 0.0
    %434 = vmatprep.subr.mxu0 0.0
    %435 = vmatpush1.xpose.msra.mxu0 0.0
    %436 = vmatprep.subr.mxu0 0.0
    %437 = vmatpush1.xpose.msra.mxu0 0.0
    %438 = vmatprep.subr.mxu0 0.0
    %439 = vmatpush1.xpose.msra.mxu0 0.0
    %440 = vmatprep.subr.mxu0 0.0
    %441 = vmatpush1.xpose.msra.mxu0 0.0
    %442 = vmatprep.subr.mxu0 0.0
    %443 = vmatpush1.xpose.msra.mxu0 %v410
    %444 = vmatprep.subr.mxu0 0.0
    %445 = vmatpush2.xpose.msra.mxu0 0.0
    %446 = vmatprep.subr.mxu0 0.0
    %447 = vmatpush2.xpose.msra.mxu0 0.0
    %448 = vmatprep.subr.mxu0 0.0
    %449 = vmatpush2.xpose.msra.mxu0 0.0
    %450 = vmatprep.subr.mxu0 0.0
    %451 = vmatpush2.xpose.msra.mxu0 0.0
    %452 = vmatprep.subr.mxu0 0.0
    %453 = vmatpush2.xpose.msra.mxu0 0.0
    %454 = vmatprep.subr.mxu0 0.0
    %455 = vmatpush2.xpose.msra.mxu0 0.0
    %456 = vmatprep.subr.mxu0 0.0
    %457 = vmatpush2.xpose.msra.mxu0 0.0
    %458 = vmatprep.subr.mxu0 0.0
    %459 = vmatpush2.xpose.msra.mxu0 0.0
    %460 = vmatprep.subr.mxu0 0.0
    %461 = vmatpush2.xpose.msra.mxu0 0.0
    %462 = vmatprep.subr.mxu0 0.0
    %463 = vmatpush2.xpose.msra.mxu0 0.0
    %464 = vmatprep.subr.mxu0 0.0
    %465 = vmatpush2.xpose.msra.mxu0 0.0
    %466 = vmatprep.subr.mxu0 0.0
    %467 = vmatpush2.xpose.msra.mxu0 0.0
    %468 = vmatprep.subr.mxu0 0.0
    %469 = vmatpush2.xpose.msra.mxu0 0.0
    %470 = vmatprep.subr.mxu0 0.0
    %471 = vmatpush2.xpose.msra.mxu0 0.0
    %472 = vmatprep.subr.mxu0 0.0
    %473 = vmatpush2.xpose.msra.mxu0 0.0
    %474 = vmatprep.subr.mxu0 0.0
    %475 = vmatpush2.xpose.msra.mxu0 0.0
    %476 = vmatprep.mubr.f32.mxu0 0.0
    %477 = vmatmul.mubr.f32.gmra.mxu0 %v407
    %v478 = vpop.f32.mrf.mxu0
    %v479 = vadd.f32 0.0, %v478
    %v480 = vpop.f32.mrf.mxu0
    %481 = vdwg.mxu0
    %v483 = vsel %vm405, %v404, 0
    %v486 = vsel %vm405, %v311, 0
    %488 = vmatprep.subr.mxu0 0.0
    %489 = vmatpush1.xpose.msra.mxu0 0.0
    %490 = vmatprep.subr.mxu0 0.0
    %491 = vmatpush1.xpose.msra.mxu0 0.0
    %492 = vmatprep.subr.mxu0 0.0
    %493 = vmatpush1.xpose.msra.mxu0 0.0
    %494 = vmatprep.subr.mxu0 0.0
    %495 = vmatpush1.xpose.msra.mxu0 0.0
    %496 = vmatprep.subr.mxu0 0.0
    %497 = vmatpush1.xpose.msra.mxu0 0.0
    %498 = vmatprep.subr.mxu0 0.0
    %499 = vmatpush1.xpose.msra.mxu0 0.0
    %500 = vmatprep.subr.mxu0 0.0
    %501 = vmatpush1.xpose.msra.mxu0 0.0
    %502 = vmatprep.subr.mxu0 0.0
    %503 = vmatpush1.xpose.msra.mxu0 0.0
    %504 = vmatprep.subr.mxu0 0.0
    %505 = vmatpush1.xpose.msra.mxu0 0.0
    %506 = vmatprep.subr.mxu0 0.0
    %507 = vmatpush1.xpose.msra.mxu0 0.0
    %508 = vmatprep.subr.mxu0 0.0
    %509 = vmatpush1.xpose.msra.mxu0 0.0
    %510 = vmatprep.subr.mxu0 0.0
    %511 = vmatpush1.xpose.msra.mxu0 0.0
    %512 = vmatprep.subr.mxu0 0.0
    %513 = vmatpush1.xpose.msra.mxu0 0.0
    %514 = vmatprep.subr.mxu0 0.0
    %515 = vmatpush1.xpose.msra.mxu0 0.0
    %516 = vmatprep.subr.mxu0 0.0
    %517 = vmatpush1.xpose.msra.mxu0 0.0
    %518 = vmatprep.subr.mxu0 0.0
    %519 = vmatpush1.xpose.msra.mxu0 %v486
    %520 = vmatprep.subr.mxu0 0.0
    %521 = vmatpush2.xpose.msra.mxu0 0.0
    %522 = vmatprep.subr.mxu0 0.0
    %523 = vmatpush2.xpose.msra.mxu0 0.0
    %524 = vmatprep.subr.mxu0 0.0
    %525 = vmatpush2.xpose.msra.mxu0 0.0
    %526 = vmatprep.subr.mxu0 0.0
    %527 = vmatpush2.xpose.msra.mxu0 0.0
    %528 = vmatprep.subr.mxu0 0.0
    %529 = vmatpush2.xpose.msra.mxu0 0.0
    %530 = vmatprep.subr.mxu0 0.0
    %531 = vmatpush2.xpose.msra.mxu0 0.0
    %532 = vmatprep.subr.mxu0 0.0
    %533 = vmatpush2.xpose.msra.mxu0 0.0
    %534 = vmatprep.subr.mxu0 0.0
    %535 = vmatpush2.xpose.msra.mxu0 0.0
    %536 = vmatprep.subr.mxu0 0.0
    %537 = vmatpush2.xpose.msra.mxu0 0.0
    %538 = vmatprep.subr.mxu0 0.0
    %539 = vmatpush2.xpose.msra.mxu0 0.0
    %540 = vmatprep.subr.mxu0 0.0
    %541 = vmatpush2.xpose.msra.mxu0 0.0
    %542 = vmatprep.subr.mxu0 0.0
    %543 = vmatpush2.xpose.msra.mxu0 0.0
    %544 = vmatprep.subr.mxu0 0.0
    %545 = vmatpush2.xpose.msra.mxu0 0.0
    %546 = vmatprep.subr.mxu0 0.0
    %547 = vmatpush2.xpose.msra.mxu0 0.0
    %548 = vmatprep.subr.mxu0 0.0
    %549 = vmatpush2.xpose.msra.mxu0 0.0
    %550 = vmatprep.subr.mxu0 0.0
    %551 = vmatpush2.xpose.msra.mxu0 0.0
    %552 = vmatprep.mubr.f32.mxu0 0.0
    %553 = vmatmul.mubr.f32.gmra.mxu0 %v483
    %v554 = vpop.f32.mrf.mxu0
    %v555 = vadd.f32 0.0, %v554
    %v556 = vpop.f32.mrf.mxu0
    %557 = vdwg.mxu0
    %558 = vrot.lane.b32.xlu0 %v403, 120
    %v559 = vpop.permute.xlu0 %558
    %560 = vrot.lane.b32.xlu0 %v306, 120
    %v561 = vpop.permute.xlu0 %560
    %v562 = vsel %vm405, %v559, 0
    %v564 = vsel %vm405, %v561, 0
    %566 = vmatprep.subr.mxu0 0.0
    %567 = vmatpush1.xpose.msra.mxu0 0.0
    %568 = vmatprep.subr.mxu0 0.0
    %569 = vmatpush1.xpose.msra.mxu0 0.0
    %570 = vmatprep.subr.mxu0 0.0
    %571 = vmatpush1.xpose.msra.mxu0 0.0
    %572 = vmatprep.subr.mxu0 0.0
    %573 = vmatpush1.xpose.msra.mxu0 0.0
    %574 = vmatprep.subr.mxu0 0.0
    %575 = vmatpush1.xpose.msra.mxu0 0.0
    %576 = vmatprep.subr.mxu0 0.0
    %577 = vmatpush1.xpose.msra.mxu0 0.0
    %578 = vmatprep.subr.mxu0 0.0
    %579 = vmatpush1.xpose.msra.mxu0 0.0
    %580 = vmatprep.subr.mxu0 0.0
    %581 = vmatpush1.xpose.msra.mxu0 0.0
    %582 = vmatprep.subr.mxu0 0.0
    %583 = vmatpush1.xpose.msra.mxu0 0.0
    %584 = vmatprep.subr.mxu0 0.0
    %585 = vmatpush1.xpose.msra.mxu0 0.0
    %586 = vmatprep.subr.mxu0 0.0
    %587 = vmatpush1.xpose.msra.mxu0 0.0
    %588 = vmatprep.subr.mxu0 0.0
    %589 = vmatpush1.xpose.msra.mxu0 0.0
    %590 = vmatprep.subr.mxu0 0.0
    %591 = vmatpush1.xpose.msra.mxu0 0.0
    %592 = vmatprep.subr.mxu0 0.0
    %593 = vmatpush1.xpose.msra.mxu0 0.0
    %594 = vmatprep.subr.mxu0 0.0
    %595 = vmatpush1.xpose.msra.mxu0 0.0
    %596 = vmatprep.subr.mxu0 0.0
    %597 = vmatpush1.xpose.msra.mxu0 %v564
    %598 = vmatprep.subr.mxu0 0.0
    %599 = vmatpush2.xpose.msra.mxu0 0.0
    %600 = vmatprep.subr.mxu0 0.0
    %601 = vmatpush2.xpose.msra.mxu0 0.0
    %602 = vmatprep.subr.mxu0 0.0
    %603 = vmatpush2.xpose.msra.mxu0 0.0
    %604 = vmatprep.subr.mxu0 0.0
    %605 = vmatpush2.xpose.msra.mxu0 0.0
    %606 = vmatprep.subr.mxu0 0.0
    %607 = vmatpush2.xpose.msra.mxu0 0.0
    %608 = vmatprep.subr.mxu0 0.0
    %609 = vmatpush2.xpose.msra.mxu0 0.0
    %610 = vmatprep.subr.mxu0 0.0
    %611 = vmatpush2.xpose.msra.mxu0 0.0
    %612 = vmatprep.subr.mxu0 0.0
    %613 = vmatpush2.xpose.msra.mxu0 0.0
    %614 = vmatprep.subr.mxu0 0.0
    %615 = vmatpush2.xpose.msra.mxu0 0.0
    %616 = vmatprep.subr.mxu0 0.0
    %617 = vmatpush2.xpose.msra.mxu0 0.0
    %618 = vmatprep.subr.mxu0 0.0
    %619 = vmatpush2.xpose.msra.mxu0 0.0
    %620 = vmatprep.subr.mxu0 0.0
    %621 = vmatpush2.xpose.msra.mxu0 0.0
    %622 = vmatprep.subr.mxu0 0.0
    %623 = vmatpush2.xpose.msra.mxu0 0.0
    %624 = vmatprep.subr.mxu0 0.0
    %625 = vmatpush2.xpose.msra.mxu0 0.0
    %626 = vmatprep.subr.mxu0 0.0
    %627 = vmatpush2.xpose.msra.mxu0 0.0
    %628 = vmatprep.subr.mxu0 0.0
    %629 = vmatpush2.xpose.msra.mxu0 0.0
    %630 = vmatprep.mubr.f32.mxu0 0.0
    %631 = vmatmul.mubr.f32.gmra.mxu0 %v562
    %v632 = vpop.f32.mrf.mxu0
    %v633 = vadd.f32 0.0, %v632
    %v634 = vpop.f32.mrf.mxu0
    %635 = vdwg.mxu0
    %636 = vrot.lane.b32.xlu0 %v404, 120
    %v637 = vpop.permute.xlu0 %636
    %638 = vrot.lane.b32.xlu0 %v311, 120
    %v639 = vpop.permute.xlu0 %638
    %v640 = vsel %vm405, %v637, 0
    %v642 = vsel %vm405, %v639, 0
    %644 = vmatprep.subr.mxu0 0.0
    %645 = vmatpush1.xpose.msra.mxu0 0.0
    %646 = vmatprep.subr.mxu0 0.0
    %647 = vmatpush1.xpose.msra.mxu0 0.0
    %648 = vmatprep.subr.mxu0 0.0
    %649 = vmatpush1.xpose.msra.mxu0 0.0
    %650 = vmatprep.subr.mxu0 0.0
    %651 = vmatpush1.xpose.msra.mxu0 0.0
    %652 = vmatprep.subr.mxu0 0.0
    %653 = vmatpush1.xpose.msra.mxu0 0.0
    %654 = vmatprep.subr.mxu0 0.0
    %655 = vmatpush1.xpose.msra.mxu0 0.0
    %656 = vmatprep.subr.mxu0 0.0
    %657 = vmatpush1.xpose.msra.mxu0 0.0
    %658 = vmatprep.subr.mxu0 0.0
    %659 = vmatpush1.xpose.msra.mxu0 0.0
    %660 = vmatprep.subr.mxu0 0.0
    %661 = vmatpush1.xpose.msra.mxu0 0.0
    %662 = vmatprep.subr.mxu0 0.0
    %663 = vmatpush1.xpose.msra.mxu0 0.0
    %664 = vmatprep.subr.mxu0 0.0
    %665 = vmatpush1.xpose.msra.mxu0 0.0
    %666 = vmatprep.subr.mxu0 0.0
    %667 = vmatpush1.xpose.msra.mxu0 0.0
    %668 = vmatprep.subr.mxu0 0.0
    %669 = vmatpush1.xpose.msra.mxu0 0.0
    %670 = vmatprep.subr.mxu0 0.0
    %671 = vmatpush1.xpose.msra.mxu0 0.0
    %672 = vmatprep.subr.mxu0 0.0
    %673 = vmatpush1.xpose.msra.mxu0 0.0
    %674 = vmatprep.subr.mxu0 0.0
    %675 = vmatpush1.xpose.msra.mxu0 %v642
    %676 = vmatprep.subr.mxu0 0.0
    %677 = vmatpush2.xpose.msra.mxu0 0.0
    %678 = vmatprep.subr.mxu0 0.0
    %679 = vmatpush2.xpose.msra.mxu0 0.0
    %680 = vmatprep.subr.mxu0 0.0
    %681 = vmatpush2.xpose.msra.mxu0 0.0
    %682 = vmatprep.subr.mxu0 0.0
    %683 = vmatpush2.xpose.msra.mxu0 0.0
    %684 = vmatprep.subr.mxu0 0.0
    %685 = vmatpush2.xpose.msra.mxu0 0.0
    %686 = vmatprep.subr.mxu0 0.0
    %687 = vmatpush2.xpose.msra.mxu0 0.0
    %688 = vmatprep.subr.mxu0 0.0
    %689 = vmatpush2.xpose.msra.mxu0 0.0
    %690 = vmatprep.subr.mxu0 0.0
    %691 = vmatpush2.xpose.msra.mxu0 0.0
    %692 = vmatprep.subr.mxu0 0.0
    %693 = vmatpush2.xpose.msra.mxu0 0.0
    %694 = vmatprep.subr.mxu0 0.0
    %695 = vmatpush2.xpose.msra.mxu0 0.0
    %696 = vmatprep.subr.mxu0 0.0
    %697 = vmatpush2.xpose.msra.mxu0 0.0
    %698 = vmatprep.subr.mxu0 0.0
    %699 = vmatpush2.xpose.msra.mxu0 0.0
    %700 = vmatprep.subr.mxu0 0.0
    %701 = vmatpush2.xpose.msra.mxu0 0.0
    %702 = vmatprep.subr.mxu0 0.0
    %703 = vmatpush2.xpose.msra.mxu0 0.0
    %704 = vmatprep.subr.mxu0 0.0
    %705 = vmatpush2.xpose.msra.mxu0 0.0
    %706 = vmatprep.subr.mxu0 0.0
    %707 = vmatpush2.xpose.msra.mxu0 0.0
    %708 = vmatprep.mubr.f32.mxu0 0.0
    %709 = vmatmul.mubr.f32.gmra.mxu0 %v640
    %v710 = vpop.f32.mrf.mxu0
    %v711 = vadd.f32 0.0, %v710
    %v712 = vpop.f32.mrf.mxu0
    %713 = vdwg.mxu0
    %714 = vrot.lane.b32.xlu0 %v403, 112
    %v715 = vpop.permute.xlu0 %714
    %716 = vrot.lane.b32.xlu0 %v306, 112
    %v717 = vpop.permute.xlu0 %716
    %v718 = vsel %vm405, %v715, 0
    %v720 = vsel %vm405, %v717, 0
    %722 = vmatprep.subr.mxu0 0.0
    %723 = vmatpush1.xpose.msra.mxu0 0.0
    %724 = vmatprep.subr.mxu0 0.0
    %725 = vmatpush1.xpose.msra.mxu0 0.0
    %726 = vmatprep.subr.mxu0 0.0
    %727 = vmatpush1.xpose.msra.mxu0 0.0
    %728 = vmatprep.subr.mxu0 0.0
    %729 = vmatpush1.xpose.msra.mxu0 0.0
    %730 = vmatprep.subr.mxu0 0.0
    %731 = vmatpush1.xpose.msra.mxu0 0.0
    %732 = vmatprep.subr.mxu0 0.0
    %733 = vmatpush1.xpose.msra.mxu0 0.0
    %734 = vmatprep.subr.mxu0 0.0
    %735 = vmatpush1.xpose.msra.mxu0 0.0
    %736 = vmatprep.subr.mxu0 0.0
    %737 = vmatpush1.xpose.msra.mxu0 0.0
    %738 = vmatprep.subr.mxu0 0.0
    %739 = vmatpush1.xpose.msra.mxu0 0.0
    %740 = vmatprep.subr.mxu0 0.0
    %741 = vmatpush1.xpose.msra.mxu0 0.0
    %742 = vmatprep.subr.mxu0 0.0
    %743 = vmatpush1.xpose.msra.mxu0 0.0
    %744 = vmatprep.subr.mxu0 0.0
    %745 = vmatpush1.xpose.msra.mxu0 0.0
    %746 = vmatprep.subr.mxu0 0.0
    %747 = vmatpush1.xpose.msra.mxu0 0.0
    %748 = vmatprep.subr.mxu0 0.0
    %749 = vmatpush1.xpose.msra.mxu0 0.0
    %750 = vmatprep.subr.mxu0 0.0
    %751 = vmatpush1.xpose.msra.mxu0 0.0
    %752 = vmatprep.subr.mxu0 0.0
    %753 = vmatpush1.xpose.msra.mxu0 %v720
    %754 = vmatprep.subr.mxu0 0.0
    %755 = vmatpush2.xpose.msra.mxu0 0.0
    %756 = vmatprep.subr.mxu0 0.0
    %757 = vmatpush2.xpose.msra.mxu0 0.0
    %758 = vmatprep.subr.mxu0 0.0
    %759 = vmatpush2.xpose.msra.mxu0 0.0
    %760 = vmatprep.subr.mxu0 0.0
    %761 = vmatpush2.xpose.msra.mxu0 0.0
    %762 = vmatprep.subr.mxu0 0.0
    %763 = vmatpush2.xpose.msra.mxu0 0.0
    %764 = vmatprep.subr.mxu0 0.0
    %765 = vmatpush2.xpose.msra.mxu0 0.0
    %766 = vmatprep.subr.mxu0 0.0
    %767 = vmatpush2.xpose.msra.mxu0 0.0
    %768 = vmatprep.subr.mxu0 0.0
    %769 = vmatpush2.xpose.msra.mxu0 0.0
    %770 = vmatprep.subr.mxu0 0.0
    %771 = vmatpush2.xpose.msra.mxu0 0.0
    %772 = vmatprep.subr.mxu0 0.0
    %773 = vmatpush2.xpose.msra.mxu0 0.0
    %774 = vmatprep.subr.mxu0 0.0
    %775 = vmatpush2.xpose.msra.mxu0 0.0
    %776 = vmatprep.subr.mxu0 0.0
    %777 = vmatpush2.xpose.msra.mxu0 0.0
    %778 = vmatprep.subr.mxu0 0.0
    %779 = vmatpush2.xpose.msra.mxu0 0.0
    %780 = vmatprep.subr.mxu0 0.0
    %781 = vmatpush2.xpose.msra.mxu0 0.0
    %782 = vmatprep.subr.mxu0 0.0
    %783 = vmatpush2.xpose.msra.mxu0 0.0
    %784 = vmatprep.subr.mxu0 0.0
    %785 = vmatpush2.xpose.msra.mxu0 0.0
    %786 = vmatprep.mubr.f32.mxu0 0.0
    %787 = vmatmul.mubr.f32.gmra.mxu0 %v718
    %v788 = vpop.f32.mrf.mxu0
    %v789 = vadd.f32 0.0, %v788
    %v790 = vpop.f32.mrf.mxu0
    %791 = vdwg.mxu0
    %792 = vrot.lane.b32.xlu0 %v404, 112
    %v793 = vpop.permute.xlu0 %792
    %794 = vrot.lane.b32.xlu0 %v311, 112
    %v795 = vpop.permute.xlu0 %794
    %v796 = vsel %vm405, %v793, 0
    %v798 = vsel %vm405, %v795, 0
    %800 = vmatprep.subr.mxu0 0.0
    %801 = vmatpush1.xpose.msra.mxu0 0.0
    %802 = vmatprep.subr.mxu0 0.0
    %803 = vmatpush1.xpose.msra.mxu0 0.0
    %804 = vmatprep.subr.mxu0 0.0
    %805 = vmatpush1.xpose.msra.mxu0 0.0
    %806 = vmatprep.subr.mxu0 0.0
    %807 = vmatpush1.xpose.msra.mxu0 0.0
    %808 = vmatprep.subr.mxu0 0.0
    %809 = vmatpush1.xpose.msra.mxu0 0.0
    %810 = vmatprep.subr.mxu0 0.0
    %811 = vmatpush1.xpose.msra.mxu0 0.0
    %812 = vmatprep.subr.mxu0 0.0
    %813 = vmatpush1.xpose.msra.mxu0 0.0
    %814 = vmatprep.subr.mxu0 0.0
    %815 = vmatpush1.xpose.msra.mxu0 0.0
    %816 = vmatprep.subr.mxu0 0.0
    %817 = vmatpush1.xpose.msra.mxu0 0.0
    %818 = vmatprep.subr.mxu0 0.0
    %819 = vmatpush1.xpose.msra.mxu0 0.0
    %820 = vmatprep.subr.mxu0 0.0
    %821 = vmatpush1.xpose.msra.mxu0 0.0
    %822 = vmatprep.subr.mxu0 0.0
    %823 = vmatpush1.xpose.msra.mxu0 0.0
    %824 = vmatprep.subr.mxu0 0.0
    %825 = vmatpush1.xpose.msra.mxu0 0.0
    %826 = vmatprep.subr.mxu0 0.0
    %827 = vmatpush1.xpose.msra.mxu0 0.0
    %828 = vmatprep.subr.mxu0 0.0
    %829 = vmatpush1.xpose.msra.mxu0 0.0
    %830 = vmatprep.subr.mxu0 0.0
    %831 = vmatpush1.xpose.msra.mxu0 %v798
    %832 = vmatprep.subr.mxu0 0.0
    %833 = vmatpush2.xpose.msra.mxu0 0.0
    %834 = vmatprep.subr.mxu0 0.0
    %835 = vmatpush2.xpose.msra.mxu0 0.0
    %836 = vmatprep.subr.mxu0 0.0
    %837 = vmatpush2.xpose.msra.mxu0 0.0
    %838 = vmatprep.subr.mxu0 0.0
    %839 = vmatpush2.xpose.msra.mxu0 0.0
    %840 = vmatprep.subr.mxu0 0.0
    %841 = vmatpush2.xpose.msra.mxu0 0.0
    %842 = vmatprep.subr.mxu0 0.0
    %843 = vmatpush2.xpose.msra.mxu0 0.0
    %844 = vmatprep.subr.mxu0 0.0
    %845 = vmatpush2.xpose.msra.mxu0 0.0
    %846 = vmatprep.subr.mxu0 0.0
    %847 = vmatpush2.xpose.msra.mxu0 0.0
    %848 = vmatprep.subr.mxu0 0.0
    %849 = vmatpush2.xpose.msra.mxu0 0.0
    %850 = vmatprep.subr.mxu0 0.0
    %851 = vmatpush2.xpose.msra.mxu0 0.0
    %852 = vmatprep.subr.mxu0 0.0
    %853 = vmatpush2.xpose.msra.mxu0 0.0
    %854 = vmatprep.subr.mxu0 0.0
    %855 = vmatpush2.xpose.msra.mxu0 0.0
    %856 = vmatprep.subr.mxu0 0.0
    %857 = vmatpush2.xpose.msra.mxu0 0.0
    %858 = vmatprep.subr.mxu0 0.0
    %859 = vmatpush2.xpose.msra.mxu0 0.0
    %860 = vmatprep.subr.mxu0 0.0
    %861 = vmatpush2.xpose.msra.mxu0 0.0
    %862 = vmatprep.subr.mxu0 0.0
    %863 = vmatpush2.xpose.msra.mxu0 0.0
    %864 = vmatprep.mubr.f32.mxu0 0.0
    %865 = vmatmul.mubr.f32.gmra.mxu0 %v796
    %v866 = vpop.f32.mrf.mxu0
    %v867 = vadd.f32 0.0, %v866
    %v868 = vpop.f32.mrf.mxu0
    %869 = vdwg.mxu0
    %870 = vrot.lane.b32.xlu0 %v403, 104
    %v871 = vpop.permute.xlu0 %870
    %872 = vrot.lane.b32.xlu0 %v306, 104
    %v873 = vpop.permute.xlu0 %872
    %v874 = vsel %vm405, %v871, 0
    %v876 = vsel %vm405, %v873, 0
    %878 = vmatprep.subr.mxu0 0.0
    %879 = vmatpush1.xpose.msra.mxu0 0.0
    %880 = vmatprep.subr.mxu0 0.0
    %881 = vmatpush1.xpose.msra.mxu0 0.0
    %882 = vmatprep.subr.mxu0 0.0
    %883 = vmatpush1.xpose.msra.mxu0 0.0
    %884 = vmatprep.subr.mxu0 0.0
    %885 = vmatpush1.xpose.msra.mxu0 0.0
    %886 = vmatprep.subr.mxu0 0.0
    %887 = vmatpush1.xpose.msra.mxu0 0.0
    %888 = vmatprep.subr.mxu0 0.0
    %889 = vmatpush1.xpose.msra.mxu0 0.0
    %890 = vmatprep.subr.mxu0 0.0
    %891 = vmatpush1.xpose.msra.mxu0 0.0
    %892 = vmatprep.subr.mxu0 0.0
    %893 = vmatpush1.xpose.msra.mxu0 0.0
    %894 = vmatprep.subr.mxu0 0.0
    %895 = vmatpush1.xpose.msra.mxu0 0.0
    %896 = vmatprep.subr.mxu0 0.0
    %897 = vmatpush1.xpose.msra.mxu0 0.0
    %898 = vmatprep.subr.mxu0 0.0
    %899 = vmatpush1.xpose.msra.mxu0 0.0
    %900 = vmatprep.subr.mxu0 0.0
    %901 = vmatpush1.xpose.msra.mxu0 0.0
    %902 = vmatprep.subr.mxu0 0.0
    %903 = vmatpush1.xpose.msra.mxu0 0.0
    %904 = vmatprep.subr.mxu0 0.0
    %905 = vmatpush1.xpose.msra.mxu0 0.0
    %906 = vmatprep.subr.mxu0 0.0
    %907 = vmatpush1.xpose.msra.mxu0 0.0
    %908 = vmatprep.subr.mxu0 0.0
    %909 = vmatpush1.xpose.msra.mxu0 %v876
    %910 = vmatprep.subr.mxu0 0.0
    %911 = vmatpush2.xpose.msra.mxu0 0.0
    %912 = vmatprep.subr.mxu0 0.0
    %913 = vmatpush2.xpose.msra.mxu0 0.0
    %914 = vmatprep.subr.mxu0 0.0
    %915 = vmatpush2.xpose.msra.mxu0 0.0
    %916 = vmatprep.subr.mxu0 0.0
    %917 = vmatpush2.xpose.msra.mxu0 0.0
    %918 = vmatprep.subr.mxu0 0.0
    %919 = vmatpush2.xpose.msra.mxu0 0.0
    %920 = vmatprep.subr.mxu0 0.0
    %921 = vmatpush2.xpose.msra.mxu0 0.0
    %922 = vmatprep.subr.mxu0 0.0
    %923 = vmatpush2.xpose.msra.mxu0 0.0
    %924 = vmatprep.subr.mxu0 0.0
    %925 = vmatpush2.xpose.msra.mxu0 0.0
    %926 = vmatprep.subr.mxu0 0.0
    %927 = vmatpush2.xpose.msra.mxu0 0.0
    %928 = vmatprep.subr.mxu0 0.0
    %929 = vmatpush2.xpose.msra.mxu0 0.0
    %930 = vmatprep.subr.mxu0 0.0
    %931 = vmatpush2.xpose.msra.mxu0 0.0
    %932 = vmatprep.subr.mxu0 0.0
    %933 = vmatpush2.xpose.msra.mxu0 0.0
    %934 = vmatprep.subr.mxu0 0.0
    %935 = vmatpush2.xpose.msra.mxu0 0.0
    %936 = vmatprep.subr.mxu0 0.0
    %937 = vmatpush2.xpose.msra.mxu0 0.0
    %938 = vmatprep.subr.mxu0 0.0
    %939 = vmatpush2.xpose.msra.mxu0 0.0
    %940 = vmatprep.subr.mxu0 0.0
    %941 = vmatpush2.xpose.msra.mxu0 0.0
    %942 = vmatprep.mubr.f32.mxu0 0.0
    %943 = vmatmul.mubr.f32.gmra.mxu0 %v874
    %v944 = vpop.f32.mrf.mxu0
    %v945 = vadd.f32 0.0, %v944
    %v946 = vpop.f32.mrf.mxu0
    %947 = vdwg.mxu0
    %948 = vrot.lane.b32.xlu0 %v404, 104
    %v949 = vpop.permute.xlu0 %948
    %950 = vrot.lane.b32.xlu0 %v311, 104
    %v951 = vpop.permute.xlu0 %950
    %v952 = vsel %vm405, %v949, 0
    %v954 = vsel %vm405, %v951, 0
    %956 = vmatprep.subr.mxu0 0.0
    %957 = vmatpush1.xpose.msra.mxu0 0.0
    %958 = vmatprep.subr.mxu0 0.0
    %959 = vmatpush1.xpose.msra.mxu0 0.0
    %960 = vmatprep.subr.mxu0 0.0
    %961 = vmatpush1.xpose.msra.mxu0 0.0
    %962 = vmatprep.subr.mxu0 0.0
    %963 = vmatpush1.xpose.msra.mxu0 0.0
    %964 = vmatprep.subr.mxu0 0.0
    %965 = vmatpush1.xpose.msra.mxu0 0.0
    %966 = vmatprep.subr.mxu0 0.0
    %967 = vmatpush1.xpose.msra.mxu0 0.0
    %968 = vmatprep.subr.mxu0 0.0
    %969 = vmatpush1.xpose.msra.mxu0 0.0
    %970 = vmatprep.subr.mxu0 0.0
    %971 = vmatpush1.xpose.msra.mxu0 0.0
    %972 = vmatprep.subr.mxu0 0.0
    %973 = vmatpush1.xpose.msra.mxu0 0.0
    %974 = vmatprep.subr.mxu0 0.0
    %975 = vmatpush1.xpose.msra.mxu0 0.0
    %976 = vmatprep.subr.mxu0 0.0
    %977 = vmatpush1.xpose.msra.mxu0 0.0
    %978 = vmatprep.subr.mxu0 0.0
    %979 = vmatpush1.xpose.msra.mxu0 0.0
    %980 = vmatprep.subr.mxu0 0.0
    %981 = vmatpush1.xpose.msra.mxu0 0.0
    %982 = vmatprep.subr.mxu0 0.0
    %983 = vmatpush1.xpose.msra.mxu0 0.0
    %984 = vmatprep.subr.mxu0 0.0
    %985 = vmatpush1.xpose.msra.mxu0 0.0
    %986 = vmatprep.subr.mxu0 0.0
    %987 = vmatpush1.xpose.msra.mxu0 %v954
    %988 = vmatprep.subr.mxu0 0.0
    %989 = vmatpush2.xpose.msra.mxu0 0.0
    %990 = vmatprep.subr.mxu0 0.0
    %991 = vmatpush2.xpose.msra.mxu0 0.0
    %992 = vmatprep.subr.mxu0 0.0
    %993 = vmatpush2.xpose.msra.mxu0 0.0
    %994 = vmatprep.subr.mxu0 0.0
    %995 = vmatpush2.xpose.msra.mxu0 0.0
    %996 = vmatprep.subr.mxu0 0.0
    %997 = vmatpush2.xpose.msra.mxu0 0.0
    %998 = vmatprep.subr.mxu0 0.0
    %999 = vmatpush2.xpose.msra.mxu0 0.0
    %1000 = vmatprep.subr.mxu0 0.0
    %1001 = vmatpush2.xpose.msra.mxu0 0.0
    %1002 = vmatprep.subr.mxu0 0.0
    %1003 = vmatpush2.xpose.msra.mxu0 0.0
    %1004 = vmatprep.subr.mxu0 0.0
    %1005 = vmatpush2.xpose.msra.mxu0 0.0
    %1006 = vmatprep.subr.mxu0 0.0
    %1007 = vmatpush2.xpose.msra.mxu0 0.0
    %1008 = vmatprep.subr.mxu0 0.0
    %1009 = vmatpush2.xpose.msra.mxu0 0.0
    %1010 = vmatprep.subr.mxu0 0.0
    %1011 = vmatpush2.xpose.msra.mxu0 0.0
    %1012 = vmatprep.subr.mxu0 0.0
    %1013 = vmatpush2.xpose.msra.mxu0 0.0
    %1014 = vmatprep.subr.mxu0 0.0
    %1015 = vmatpush2.xpose.msra.mxu0 0.0
    %1016 = vmatprep.subr.mxu0 0.0
    %1017 = vmatpush2.xpose.msra.mxu0 0.0
    %1018 = vmatprep.subr.mxu0 0.0
    %1019 = vmatpush2.xpose.msra.mxu0 0.0
    %1020 = vmatprep.mubr.f32.mxu0 0.0
    %1021 = vmatmul.mubr.f32.gmra.mxu0 %v952
    %v1022 = vpop.f32.mrf.mxu0
    %v1023 = vadd.f32 0.0, %v1022
    %v1024 = vpop.f32.mrf.mxu0
    %1025 = vdwg.mxu0
    %v1026 = vsel %vm405, %v479, -inf
    %1027 = vmax.xlane.f32.xlu0 %v1026
    %v1028 = vpop.xlane.xlu0 %1027
    %v1029 = vsel %vm405, %v555, -inf
    %1030 = vmax.xlane.f32.xlu0 %v1029
    %v1031 = vpop.xlane.xlu0 %1030
    %v1032 = vsel %vm405, %v633, -inf
    %1033 = vmax.xlane.f32.xlu0 %v1032
    %v1034 = vpop.xlane.xlu0 %1033
    %v1035 = vsel %vm405, %v711, -inf
    %1036 = vmax.xlane.f32.xlu0 %v1035
    %v1037 = vpop.xlane.xlu0 %1036
    %v1038 = vsel %vm405, %v789, -inf
    %1039 = vmax.xlane.f32.xlu0 %v1038
    %v1040 = vpop.xlane.xlu0 %1039
    %v1041 = vsel %vm405, %v867, -inf
    %1042 = vmax.xlane.f32.xlu0 %v1041
    %v1043 = vpop.xlane.xlu0 %1042
    %v1044 = vsel %vm405, %v945, -inf
    %1045 = vmax.xlane.f32.xlu0 %v1044
    %v1046 = vpop.xlane.xlu0 %1045
    %v1047 = vsel %vm405, %v1023, -inf
    %1048 = vmax.xlane.f32.xlu0 %v1047
    %v1049 = vpop.xlane.xlu0 %1048
    %v1050 = vsub.f32 %v479, %v1028
    %v1051 = vsub.f32 %v555, %v1031
    %v1052 = vsub.f32 %v633, %v1034
    %v1053 = vsub.f32 %v711, %v1037
    %v1054 = vsub.f32 %v789, %v1040
    %v1055 = vsub.f32 %v867, %v1043
    %v1056 = vsub.f32 %v945, %v1046
    %v1057 = vsub.f32 %v1023, %v1049
    %v1058 = vmul.f32 %v1050, 1.442695
    %v1059 = vpow.pop %v1058
    %v1060 = vmul.f32 %v1051, 1.442695
    %v1061 = vpow.pop %v1060
    %v1062 = vmul.f32 %v1052, 1.442695
    %v1063 = vpow.pop %v1062
    %v1064 = vmul.f32 %v1053, 1.442695
    %v1065 = vpow.pop %v1064
    %v1066 = vmul.f32 %v1054, 1.442695
    %v1067 = vpow.pop %v1066
    %v1068 = vmul.f32 %v1055, 1.442695
    %v1069 = vpow.pop %v1068
    %v1070 = vmul.f32 %v1056, 1.442695
    %v1071 = vpow.pop %v1070
    %v1072 = vmul.f32 %v1057, 1.442695
    %v1073 = vpow.pop %v1072
    %v1074 = vsel %vm405, %v1059, 0.0
    %1075 = vadd.xlane.f32.xlu0 %v1074
    %v1076 = vpop.xlane.xlu0 %1075
    %v1077 = vsel %vm405, %v1061, 0.0
    %1078 = vadd.xlane.f32.xlu0 %v1077
    %v1079 = vpop.xlane.xlu0 %1078
    %v1080 = vsel %vm405, %v1063, 0.0
    %1081 = vadd.xlane.f32.xlu0 %v1080
    %v1082 = vpop.xlane.xlu0 %1081
    %v1083 = vsel %vm405, %v1065, 0.0
    %1084 = vadd.xlane.f32.xlu0 %v1083
    %v1085 = vpop.xlane.xlu0 %1084
    %v1086 = vsel %vm405, %v1067, 0.0
    %1087 = vadd.xlane.f32.xlu0 %v1086
    %v1088 = vpop.xlane.xlu0 %1087
    %v1089 = vsel %vm405, %v1069, 0.0
    %1090 = vadd.xlane.f32.xlu0 %v1089
    %v1091 = vpop.xlane.xlu0 %1090
    %v1092 = vsel %vm405, %v1071, 0.0
    %1093 = vadd.xlane.f32.xlu0 %v1092
    %v1094 = vpop.xlane.xlu0 %1093
    %v1095 = vsel %vm405, %v1073, 0.0
    %1096 = vadd.xlane.f32.xlu0 %v1095
    %v1097 = vpop.xlane.xlu0 %1096
    %v1098 = vrcp.pop %v1076
    %v1099 = vmul.f32 %v1059, %v1098
    %v1100 = vrcp.pop %v1079
    %v1101 = vmul.f32 %v1061, %v1100
    %v1102 = vrcp.pop %v1082
    %v1103 = vmul.f32 %v1063, %v1102
    %v1104 = vrcp.pop %v1085
    %v1105 = vmul.f32 %v1065, %v1104
    %v1106 = vrcp.pop %v1088
    %v1107 = vmul.f32 %v1067, %v1106
    %v1108 = vrcp.pop %v1091
    %v1109 = vmul.f32 %v1069, %v1108
    %v1110 = vrcp.pop %v1094
    %v1111 = vmul.f32 %v1071, %v1110
    %v1112 = vrcp.pop %v1097
    %v1113 = vmul.f32 %v1073, %v1112
    %v1115 = vsel %vm405, %v1099, 0
    %1117 = vmatprep.subr.mxu0 0.0
    %1118 = vmatpush1.msra.mxu0 0.0
    %1119 = vmatprep.subr.mxu0 0.0
    %1120 = vmatpush1.msra.mxu0 0.0
    %1121 = vmatprep.subr.mxu0 0.0
    %1122 = vmatpush1.msra.mxu0 0.0
    %1123 = vmatprep.subr.mxu0 0.0
    %1124 = vmatpush1.msra.mxu0 0.0
    %1125 = vmatprep.subr.mxu0 0.0
    %1126 = vmatpush1.msra.mxu0 0.0
    %1127 = vmatprep.subr.mxu0 0.0
    %1128 = vmatpush1.msra.mxu0 0.0
    %1129 = vmatprep.subr.mxu0 0.0
    %1130 = vmatpush1.msra.mxu0 0.0
    %1131 = vmatprep.subr.mxu0 0.0
    %1132 = vmatpush1.msra.mxu0 0.0
    %1133 = vmatprep.subr.mxu0 0.0
    %1134 = vmatpush1.msra.mxu0 0.0
    %1135 = vmatprep.subr.mxu0 0.0
    %1136 = vmatpush1.msra.mxu0 0.0
    %1137 = vmatprep.subr.mxu0 0.0
    %1138 = vmatpush1.msra.mxu0 0.0
    %1139 = vmatprep.subr.mxu0 0.0
    %1140 = vmatpush1.msra.mxu0 0.0
    %1141 = vmatprep.subr.mxu0 0.0
    %1142 = vmatpush1.msra.mxu0 0.0
    %1143 = vmatprep.subr.mxu0 0.0
    %1144 = vmatpush1.msra.mxu0 0.0
    %1145 = vmatprep.subr.mxu0 0.0
    %1146 = vmatpush1.msra.mxu0 0.0
    %1147 = vmatprep.subr.mxu0 0.0
    %1148 = vmatpush1.msra.mxu0 %v395
    %1149 = vmatprep.subr.mxu0 0.0
    %1150 = vmatpush2.msra.mxu0 0.0
    %1151 = vmatprep.subr.mxu0 0.0
    %1152 = vmatpush2.msra.mxu0 0.0
    %1153 = vmatprep.subr.mxu0 0.0
    %1154 = vmatpush2.msra.mxu0 0.0
    %1155 = vmatprep.subr.mxu0 0.0
    %1156 = vmatpush2.msra.mxu0 0.0
    %1157 = vmatprep.subr.mxu0 0.0
    %1158 = vmatpush2.msra.mxu0 0.0
    %1159 = vmatprep.subr.mxu0 0.0
    %1160 = vmatpush2.msra.mxu0 0.0
    %1161 = vmatprep.subr.mxu0 0.0
    %1162 = vmatpush2.msra.mxu0 0.0
    %1163 = vmatprep.subr.mxu0 0.0
    %1164 = vmatpush2.msra.mxu0 0.0
    %1165 = vmatprep.subr.mxu0 0.0
    %1166 = vmatpush2.msra.mxu0 0.0
    %1167 = vmatprep.subr.mxu0 0.0
    %1168 = vmatpush2.msra.mxu0 0.0
    %1169 = vmatprep.subr.mxu0 0.0
    %1170 = vmatpush2.msra.mxu0 0.0
    %1171 = vmatprep.subr.mxu0 0.0
    %1172 = vmatpush2.msra.mxu0 0.0
    %1173 = vmatprep.subr.mxu0 0.0
    %1174 = vmatpush2.msra.mxu0 0.0
    %1175 = vmatprep.subr.mxu0 0.0
    %1176 = vmatpush2.msra.mxu0 0.0
    %1177 = vmatprep.subr.mxu0 0.0
    %1178 = vmatpush2.msra.mxu0 0.0
    %1179 = vmatprep.subr.mxu0 0.0
    %1180 = vmatpush2.msra.mxu0 0.0
    %1181 = vmatprep.mubr.f32.mxu0 0.0
    %1182 = vmatmul.mubr.f32.gmra.mxu0 %v1115
    %v1183 = vpop.f32.mrf.mxu0
    %v1184 = vadd.f32 0.0, %v1183
    %v1185 = vpop.f32.mrf.mxu0
    %1186 = vdwg.mxu0
    %v1188 = vsel %vm405, %v1101, 0
    %1190 = vmatprep.subr.mxu0 0.0
    %1191 = vmatpush1.msra.mxu0 0.0
    %1192 = vmatprep.subr.mxu0 0.0
    %1193 = vmatpush1.msra.mxu0 0.0
    %1194 = vmatprep.subr.mxu0 0.0
    %1195 = vmatpush1.msra.mxu0 0.0
    %1196 = vmatprep.subr.mxu0 0.0
    %1197 = vmatpush1.msra.mxu0 0.0
    %1198 = vmatprep.subr.mxu0 0.0
    %1199 = vmatpush1.msra.mxu0 0.0
    %1200 = vmatprep.subr.mxu0 0.0
    %1201 = vmatpush1.msra.mxu0 0.0
    %1202 = vmatprep.subr.mxu0 0.0
    %1203 = vmatpush1.msra.mxu0 0.0
    %1204 = vmatprep.subr.mxu0 0.0
    %1205 = vmatpush1.msra.mxu0 0.0
    %1206 = vmatprep.subr.mxu0 0.0
    %1207 = vmatpush1.msra.mxu0 0.0
    %1208 = vmatprep.subr.mxu0 0.0
    %1209 = vmatpush1.msra.mxu0 0.0
    %1210 = vmatprep.subr.mxu0 0.0
    %1211 = vmatpush1.msra.mxu0 0.0
    %1212 = vmatprep.subr.mxu0 0.0
    %1213 = vmatpush1.msra.mxu0 0.0
    %1214 = vmatprep.subr.mxu0 0.0
    %1215 = vmatpush1.msra.mxu0 0.0
    %1216 = vmatprep.subr.mxu0 0.0
    %1217 = vmatpush1.msra.mxu0 0.0
    %1218 = vmatprep.subr.mxu0 0.0
    %1219 = vmatpush1.msra.mxu0 0.0
    %1220 = vmatprep.subr.mxu0 0.0
    %1221 = vmatpush1.msra.mxu0 %v400
    %1222 = vmatprep.subr.mxu0 0.0
    %1223 = vmatpush2.msra.mxu0 0.0
    %1224 = vmatprep.subr.mxu0 0.0
    %1225 = vmatpush2.msra.mxu0 0.0
    %1226 = vmatprep.subr.mxu0 0.0
    %1227 = vmatpush2.msra.mxu0 0.0
    %1228 = vmatprep.subr.mxu0 0.0
    %1229 = vmatpush2.msra.mxu0 0.0
    %1230 = vmatprep.subr.mxu0 0.0
    %1231 = vmatpush2.msra.mxu0 0.0
    %1232 = vmatprep.subr.mxu0 0.0
    %1233 = vmatpush2.msra.mxu0 0.0
    %1234 = vmatprep.subr.mxu0 0.0
    %1235 = vmatpush2.msra.mxu0 0.0
    %1236 = vmatprep.subr.mxu0 0.0
    %1237 = vmatpush2.msra.mxu0 0.0
    %1238 = vmatprep.subr.mxu0 0.0
    %1239 = vmatpush2.msra.mxu0 0.0
    %1240 = vmatprep.subr.mxu0 0.0
    %1241 = vmatpush2.msra.mxu0 0.0
    %1242 = vmatprep.subr.mxu0 0.0
    %1243 = vmatpush2.msra.mxu0 0.0
    %1244 = vmatprep.subr.mxu0 0.0
    %1245 = vmatpush2.msra.mxu0 0.0
    %1246 = vmatprep.subr.mxu0 0.0
    %1247 = vmatpush2.msra.mxu0 0.0
    %1248 = vmatprep.subr.mxu0 0.0
    %1249 = vmatpush2.msra.mxu0 0.0
    %1250 = vmatprep.subr.mxu0 0.0
    %1251 = vmatpush2.msra.mxu0 0.0
    %1252 = vmatprep.subr.mxu0 0.0
    %1253 = vmatpush2.msra.mxu0 0.0
    %1254 = vmatprep.mubr.f32.mxu0 0.0
    %1255 = vmatmul.mubr.f32.gmra.mxu0 %v1188
    %v1256 = vpop.f32.mrf.mxu0
    %v1257 = vadd.f32 0.0, %v1256
    %v1258 = vpop.f32.mrf.mxu0
    %1259 = vdwg.mxu0
    %1261 = vrot.lane.b32.xlu0 %v395, 120
    %v1262 = vpop.permute.xlu0 %1261
    %v1265 = vsel %vm405, %v1103, 0
    %1267 = vmatprep.subr.mxu0 0.0
    %1268 = vmatpush1.msra.mxu0 0.0
    %1269 = vmatprep.subr.mxu0 0.0
    %1270 = vmatpush1.msra.mxu0 0.0
    %1271 = vmatprep.subr.mxu0 0.0
    %1272 = vmatpush1.msra.mxu0 0.0
    %1273 = vmatprep.subr.mxu0 0.0
    %1274 = vmatpush1.msra.mxu0 0.0
    %1275 = vmatprep.subr.mxu0 0.0
    %1276 = vmatpush1.msra.mxu0 0.0
    %1277 = vmatprep.subr.mxu0 0.0
    %1278 = vmatpush1.msra.mxu0 0.0
    %1279 = vmatprep.subr.mxu0 0.0
    %1280 = vmatpush1.msra.mxu0 0.0
    %1281 = vmatprep.subr.mxu0 0.0
    %1282 = vmatpush1.msra.mxu0 0.0
    %1283 = vmatprep.subr.mxu0 0.0
    %1284 = vmatpush1.msra.mxu0 0.0
    %1285 = vmatprep.subr.mxu0 0.0
    %1286 = vmatpush1.msra.mxu0 0.0
    %1287 = vmatprep.subr.mxu0 0.0
    %1288 = vmatpush1.msra.mxu0 0.0
    %1289 = vmatprep.subr.mxu0 0.0
    %1290 = vmatpush1.msra.mxu0 0.0
    %1291 = vmatprep.subr.mxu0 0.0
    %1292 = vmatpush1.msra.mxu0 0.0
    %1293 = vmatprep.subr.mxu0 0.0
    %1294 = vmatpush1.msra.mxu0 0.0
    %1295 = vmatprep.subr.mxu0 0.0
    %1296 = vmatpush1.msra.mxu0 0.0
    %1297 = vmatprep.subr.mxu0 0.0
    %1298 = vmatpush1.msra.mxu0 %v1262
    %1299 = vmatprep.subr.mxu0 0.0
    %1300 = vmatpush2.msra.mxu0 0.0
    %1301 = vmatprep.subr.mxu0 0.0
    %1302 = vmatpush2.msra.mxu0 0.0
    %1303 = vmatprep.subr.mxu0 0.0
    %1304 = vmatpush2.msra.mxu0 0.0
    %1305 = vmatprep.subr.mxu0 0.0
    %1306 = vmatpush2.msra.mxu0 0.0
    %1307 = vmatprep.subr.mxu0 0.0
    %1308 = vmatpush2.msra.mxu0 0.0
    %1309 = vmatprep.subr.mxu0 0.0
    %1310 = vmatpush2.msra.mxu0 0.0
    %1311 = vmatprep.subr.mxu0 0.0
    %1312 = vmatpush2.msra.mxu0 0.0
    %1313 = vmatprep.subr.mxu0 0.0
    %1314 = vmatpush2.msra.mxu0 0.0
    %1315 = vmatprep.subr.mxu0 0.0
    %1316 = vmatpush2.msra.mxu0 0.0
    %1317 = vmatprep.subr.mxu0 0.0
    %1318 = vmatpush2.msra.mxu0 0.0
    %1319 = vmatprep.subr.mxu0 0.0
    %1320 = vmatpush2.msra.mxu0 0.0
    %1321 = vmatprep.subr.mxu0 0.0
    %1322 = vmatpush2.msra.mxu0 0.0
    %1323 = vmatprep.subr.mxu0 0.0
    %1324 = vmatpush2.msra.mxu0 0.0
    %1325 = vmatprep.subr.mxu0 0.0
    %1326 = vmatpush2.msra.mxu0 0.0
    %1327 = vmatprep.subr.mxu0 0.0
    %1328 = vmatpush2.msra.mxu0 0.0
    %1329 = vmatprep.subr.mxu0 0.0
    %1330 = vmatpush2.msra.mxu0 0.0
    %1331 = vmatprep.mubr.f32.mxu0 0.0
    %1332 = vmatmul.mubr.f32.gmra.mxu0 %v1265
    %v1333 = vpop.f32.mrf.mxu0
    %v1334 = vadd.f32 0.0, %v1333
    %v1335 = vpop.f32.mrf.mxu0
    %1336 = vdwg.mxu0
    %1338 = vrot.lane.b32.xlu0 %v400, 120
    %v1339 = vpop.permute.xlu0 %1338
    %v1342 = vsel %vm405, %v1105, 0
    %1344 = vmatprep.subr.mxu0 0.0
    %1345 = vmatpush1.msra.mxu0 0.0
    %1346 = vmatprep.subr.mxu0 0.0
    %1347 = vmatpush1.msra.mxu0 0.0
    %1348 = vmatprep.subr.mxu0 0.0
    %1349 = vmatpush1.msra.mxu0 0.0
    %1350 = vmatprep.subr.mxu0 0.0
    %1351 = vmatpush1.msra.mxu0 0.0
    %1352 = vmatprep.subr.mxu0 0.0
    %1353 = vmatpush1.msra.mxu0 0.0
    %1354 = vmatprep.subr.mxu0 0.0
    %1355 = vmatpush1.msra.mxu0 0.0
    %1356 = vmatprep.subr.mxu0 0.0
    %1357 = vmatpush1.msra.mxu0 0.0
    %1358 = vmatprep.subr.mxu0 0.0
    %1359 = vmatpush1.msra.mxu0 0.0
    %1360 = vmatprep.subr.mxu0 0.0
    %1361 = vmatpush1.msra.mxu0 0.0
    %1362 = vmatprep.subr.mxu0 0.0
    %1363 = vmatpush1.msra.mxu0 0.0
    %1364 = vmatprep.subr.mxu0 0.0
    %1365 = vmatpush1.msra.mxu0 0.0
    %1366 = vmatprep.subr.mxu0 0.0
    %1367 = vmatpush1.msra.mxu0 0.0
    %1368 = vmatprep.subr.mxu0 0.0
    %1369 = vmatpush1.msra.mxu0 0.0
    %1370 = vmatprep.subr.mxu0 0.0
    %1371 = vmatpush1.msra.mxu0 0.0
    %1372 = vmatprep.subr.mxu0 0.0
    %1373 = vmatpush1.msra.mxu0 0.0
    %1374 = vmatprep.subr.mxu0 0.0
    %1375 = vmatpush1.msra.mxu0 %v1339
    %1376 = vmatprep.subr.mxu0 0.0
    %1377 = vmatpush2.msra.mxu0 0.0
    %1378 = vmatprep.subr.mxu0 0.0
    %1379 = vmatpush2.msra.mxu0 0.0
    %1380 = vmatprep.subr.mxu0 0.0
    %1381 = vmatpush2.msra.mxu0 0.0
    %1382 = vmatprep.subr.mxu0 0.0
    %1383 = vmatpush2.msra.mxu0 0.0
    %1384 = vmatprep.subr.mxu0 0.0
    %1385 = vmatpush2.msra.mxu0 0.0
    %1386 = vmatprep.subr.mxu0 0.0
    %1387 = vmatpush2.msra.mxu0 0.0
    %1388 = vmatprep.subr.mxu0 0.0
    %1389 = vmatpush2.msra.mxu0 0.0
    %1390 = vmatprep.subr.mxu0 0.0
    %1391 = vmatpush2.msra.mxu0 0.0
    %1392 = vmatprep.subr.mxu0 0.0
    %1393 = vmatpush2.msra.mxu0 0.0
    %1394 = vmatprep.subr.mxu0 0.0
    %1395 = vmatpush2.msra.mxu0 0.0
    %1396 = vmatprep.subr.mxu0 0.0
    %1397 = vmatpush2.msra.mxu0 0.0
    %1398 = vmatprep.subr.mxu0 0.0
    %1399 = vmatpush2.msra.mxu0 0.0
    %1400 = vmatprep.subr.mxu0 0.0
    %1401 = vmatpush2.msra.mxu0 0.0
    %1402 = vmatprep.subr.mxu0 0.0
    %1403 = vmatpush2.msra.mxu0 0.0
    %1404 = vmatprep.subr.mxu0 0.0
    %1405 = vmatpush2.msra.mxu0 0.0
    %1406 = vmatprep.subr.mxu0 0.0
    %1407 = vmatpush2.msra.mxu0 0.0
    %1408 = vmatprep.mubr.f32.mxu0 0.0
    %1409 = vmatmul.mubr.f32.gmra.mxu0 %v1342
    %v1410 = vpop.f32.mrf.mxu0
    %v1411 = vadd.f32 0.0, %v1410
    %v1412 = vpop.f32.mrf.mxu0
    %1413 = vdwg.mxu0
    %1414 = vrot.lane.b32.xlu0 %v395, 112
    %v1415 = vpop.permute.xlu0 %1414
    %v1418 = vsel %vm405, %v1107, 0
    %1420 = vmatprep.subr.mxu0 0.0
    %1421 = vmatpush1.msra.mxu0 0.0
    %1422 = vmatprep.subr.mxu0 0.0
    %1423 = vmatpush1.msra.mxu0 0.0
    %1424 = vmatprep.subr.mxu0 0.0
    %1425 = vmatpush1.msra.mxu0 0.0
    %1426 = vmatprep.subr.mxu0 0.0
    %1427 = vmatpush1.msra.mxu0 0.0
    %1428 = vmatprep.subr.mxu0 0.0
    %1429 = vmatpush1.msra.mxu0 0.0
    %1430 = vmatprep.subr.mxu0 0.0
    %1431 = vmatpush1.msra.mxu0 0.0
    %1432 = vmatprep.subr.mxu0 0.0
    %1433 = vmatpush1.msra.mxu0 0.0
    %1434 = vmatprep.subr.mxu0 0.0
    %1435 = vmatpush1.msra.mxu0 0.0
    %1436 = vmatprep.subr.mxu0 0.0
    %1437 = vmatpush1.msra.mxu0 0.0
    %1438 = vmatprep.subr.mxu0 0.0
    %1439 = vmatpush1.msra.mxu0 0.0
    %1440 = vmatprep.subr.mxu0 0.0
    %1441 = vmatpush1.msra.mxu0 0.0
    %1442 = vmatprep.subr.mxu0 0.0
    %1443 = vmatpush1.msra.mxu0 0.0
    %1444 = vmatprep.subr.mxu0 0.0
    %1445 = vmatpush1.msra.mxu0 0.0
    %1446 = vmatprep.subr.mxu0 0.0
    %1447 = vmatpush1.msra.mxu0 0.0
    %1448 = vmatprep.subr.mxu0 0.0
    %1449 = vmatpush1.msra.mxu0 0.0
    %1450 = vmatprep.subr.mxu0 0.0
    %1451 = vmatpush1.msra.mxu0 %v1415
    %1452 = vmatprep.subr.mxu0 0.0
    %1453 = vmatpush2.msra.mxu0 0.0
    %1454 = vmatprep.subr.mxu0 0.0
    %1455 = vmatpush2.msra.mxu0 0.0
    %1456 = vmatprep.subr.mxu0 0.0
    %1457 = vmatpush2.msra.mxu0 0.0
    %1458 = vmatprep.subr.mxu0 0.0
    %1459 = vmatpush2.msra.mxu0 0.0
    %1460 = vmatprep.subr.mxu0 0.0
    %1461 = vmatpush2.msra.mxu0 0.0
    %1462 = vmatprep.subr.mxu0 0.0
    %1463 = vmatpush2.msra.mxu0 0.0
    %1464 = vmatprep.subr.mxu0 0.0
    %1465 = vmatpush2.msra.mxu0 0.0
    %1466 = vmatprep.subr.mxu0 0.0
    %1467 = vmatpush2.msra.mxu0 0.0
    %1468 = vmatprep.subr.mxu0 0.0
    %1469 = vmatpush2.msra.mxu0 0.0
    %1470 = vmatprep.subr.mxu0 0.0
    %1471 = vmatpush2.msra.mxu0 0.0
    %1472 = vmatprep.subr.mxu0 0.0
    %1473 = vmatpush2.msra.mxu0 0.0
    %1474 = vmatprep.subr.mxu0 0.0
    %1475 = vmatpush2.msra.mxu0 0.0
    %1476 = vmatprep.subr.mxu0 0.0
    %1477 = vmatpush2.msra.mxu0 0.0
    %1478 = vmatprep.subr.mxu0 0.0
    %1479 = vmatpush2.msra.mxu0 0.0
    %1480 = vmatprep.subr.mxu0 0.0
    %1481 = vmatpush2.msra.mxu0 0.0
    %1482 = vmatprep.subr.mxu0 0.0
    %1483 = vmatpush2.msra.mxu0 0.0
    %1484 = vmatprep.mubr.f32.mxu0 0.0
    %1485 = vmatmul.mubr.f32.gmra.mxu0 %v1418
    %v1486 = vpop.f32.mrf.mxu0
    %v1487 = vadd.f32 0.0, %v1486
    %v1488 = vpop.f32.mrf.mxu0
    %1489 = vdwg.mxu0
    %1490 = vrot.lane.b32.xlu0 %v400, 112
    %v1491 = vpop.permute.xlu0 %1490
    %v1494 = vsel %vm405, %v1109, 0
    %1496 = vmatprep.subr.mxu0 0.0
    %1497 = vmatpush1.msra.mxu0 0.0
    %1498 = vmatprep.subr.mxu0 0.0
    %1499 = vmatpush1.msra.mxu0 0.0
    %1500 = vmatprep.subr.mxu0 0.0
    %1501 = vmatpush1.msra.mxu0 0.0
    %1502 = vmatprep.subr.mxu0 0.0
    %1503 = vmatpush1.msra.mxu0 0.0
    %1504 = vmatprep.subr.mxu0 0.0
    %1505 = vmatpush1.msra.mxu0 0.0
    %1506 = vmatprep.subr.mxu0 0.0
    %1507 = vmatpush1.msra.mxu0 0.0
    %1508 = vmatprep.subr.mxu0 0.0
    %1509 = vmatpush1.msra.mxu0 0.0
    %1510 = vmatprep.subr.mxu0 0.0
    %1511 = vmatpush1.msra.mxu0 0.0
    %1512 = vmatprep.subr.mxu0 0.0
    %1513 = vmatpush1.msra.mxu0 0.0
    %1514 = vmatprep.subr.mxu0 0.0
    %1515 = vmatpush1.msra.mxu0 0.0
    %1516 = vmatprep.subr.mxu0 0.0
    %1517 = vmatpush1.msra.mxu0 0.0
    %1518 = vmatprep.subr.mxu0 0.0
    %1519 = vmatpush1.msra.mxu0 0.0
    %1520 = vmatprep.subr.mxu0 0.0
    %1521 = vmatpush1.msra.mxu0 0.0
    %1522 = vmatprep.subr.mxu0 0.0
    %1523 = vmatpush1.msra.mxu0 0.0
    %1524 = vmatprep.subr.mxu0 0.0
    %1525 = vmatpush1.msra.mxu0 0.0
    %1526 = vmatprep.subr.mxu0 0.0
    %1527 = vmatpush1.msra.mxu0 %v1491
    %1528 = vmatprep.subr.mxu0 0.0
    %1529 = vmatpush2.msra.mxu0 0.0
    %1530 = vmatprep.subr.mxu0 0.0
    %1531 = vmatpush2.msra.mxu0 0.0
    %1532 = vmatprep.subr.mxu0 0.0
    %1533 = vmatpush2.msra.mxu0 0.0
    %1534 = vmatprep.subr.mxu0 0.0
    %1535 = vmatpush2.msra.mxu0 0.0
    %1536 = vmatprep.subr.mxu0 0.0
    %1537 = vmatpush2.msra.mxu0 0.0
    %1538 = vmatprep.subr.mxu0 0.0
    %1539 = vmatpush2.msra.mxu0 0.0
    %1540 = vmatprep.subr.mxu0 0.0
    %1541 = vmatpush2.msra.mxu0 0.0
    %1542 = vmatprep.subr.mxu0 0.0
    %1543 = vmatpush2.msra.mxu0 0.0
    %1544 = vmatprep.subr.mxu0 0.0
    %1545 = vmatpush2.msra.mxu0 0.0
    %1546 = vmatprep.subr.mxu0 0.0
    %1547 = vmatpush2.msra.mxu0 0.0
    %1548 = vmatprep.subr.mxu0 0.0
    %1549 = vmatpush2.msra.mxu0 0.0
    %1550 = vmatprep.subr.mxu0 0.0
    %1551 = vmatpush2.msra.mxu0 0.0
    %1552 = vmatprep.subr.mxu0 0.0
    %1553 = vmatpush2.msra.mxu0 0.0
    %1554 = vmatprep.subr.mxu0 0.0
    %1555 = vmatpush2.msra.mxu0 0.0
    %1556 = vmatprep.subr.mxu0 0.0
    %1557 = vmatpush2.msra.mxu0 0.0
    %1558 = vmatprep.subr.mxu0 0.0
    %1559 = vmatpush2.msra.mxu0 0.0
    %1560 = vmatprep.mubr.f32.mxu0 0.0
    %1561 = vmatmul.mubr.f32.gmra.mxu0 %v1494
    %v1562 = vpop.f32.mrf.mxu0
    %v1563 = vadd.f32 0.0, %v1562
    %v1564 = vpop.f32.mrf.mxu0
    %1565 = vdwg.mxu0
    %1566 = vrot.lane.b32.xlu0 %v395, 104
    %v1567 = vpop.permute.xlu0 %1566
    %v1570 = vsel %vm405, %v1111, 0
    %1572 = vmatprep.subr.mxu0 0.0
    %1573 = vmatpush1.msra.mxu0 0.0
    %1574 = vmatprep.subr.mxu0 0.0
    %1575 = vmatpush1.msra.mxu0 0.0
    %1576 = vmatprep.subr.mxu0 0.0
    %1577 = vmatpush1.msra.mxu0 0.0
    %1578 = vmatprep.subr.mxu0 0.0
    %1579 = vmatpush1.msra.mxu0 0.0
    %1580 = vmatprep.subr.mxu0 0.0
    %1581 = vmatpush1.msra.mxu0 0.0
    %1582 = vmatprep.subr.mxu0 0.0
    %1583 = vmatpush1.msra.mxu0 0.0
    %1584 = vmatprep.subr.mxu0 0.0
    %1585 = vmatpush1.msra.mxu0 0.0
    %1586 = vmatprep.subr.mxu0 0.0
    %1587 = vmatpush1.msra.mxu0 0.0
    %1588 = vmatprep.subr.mxu0 0.0
    %1589 = vmatpush1.msra.mxu0 0.0
    %1590 = vmatprep.subr.mxu0 0.0
    %1591 = vmatpush1.msra.mxu0 0.0
    %1592 = vmatprep.subr.mxu0 0.0
    %1593 = vmatpush1.msra.mxu0 0.0
    %1594 = vmatprep.subr.mxu0 0.0
    %1595 = vmatpush1.msra.mxu0 0.0
    %1596 = vmatprep.subr.mxu0 0.0
    %1597 = vmatpush1.msra.mxu0 0.0
    %1598 = vmatprep.subr.mxu0 0.0
    %1599 = vmatpush1.msra.mxu0 0.0
    %1600 = vmatprep.subr.mxu0 0.0
    %1601 = vmatpush1.msra.mxu0 0.0
    %1602 = vmatprep.subr.mxu0 0.0
    %1603 = vmatpush1.msra.mxu0 %v1567
    %1604 = vmatprep.subr.mxu0 0.0
    %1605 = vmatpush2.msra.mxu0 0.0
    %1606 = vmatprep.subr.mxu0 0.0
    %1607 = vmatpush2.msra.mxu0 0.0
    %1608 = vmatprep.subr.mxu0 0.0
    %1609 = vmatpush2.msra.mxu0 0.0
    %1610 = vmatprep.subr.mxu0 0.0
    %1611 = vmatpush2.msra.mxu0 0.0
    %1612 = vmatprep.subr.mxu0 0.0
    %1613 = vmatpush2.msra.mxu0 0.0
    %1614 = vmatprep.subr.mxu0 0.0
    %1615 = vmatpush2.msra.mxu0 0.0
    %1616 = vmatprep.subr.mxu0 0.0
    %1617 = vmatpush2.msra.mxu0 0.0
    %1618 = vmatprep.subr.mxu0 0.0
    %1619 = vmatpush2.msra.mxu0 0.0
    %1620 = vmatprep.subr.mxu0 0.0
    %1621 = vmatpush2.msra.mxu0 0.0
    %1622 = vmatprep.subr.mxu0 0.0
    %1623 = vmatpush2.msra.mxu0 0.0
    %1624 = vmatprep.subr.mxu0 0.0
    %1625 = vmatpush2.msra.mxu0 0.0
    %1626 = vmatprep.subr.mxu0 0.0
    %1627 = vmatpush2.msra.mxu0 0.0
    %1628 = vmatprep.subr.mxu0 0.0
    %1629 = vmatpush2.msra.mxu0 0.0
    %1630 = vmatprep.subr.mxu0 0.0
    %1631 = vmatpush2.msra.mxu0 0.0
    %1632 = vmatprep.subr.mxu0 0.0
    %1633 = vmatpush2.msra.mxu0 0.0
    %1634 = vmatprep.subr.mxu0 0.0
    %1635 = vmatpush2.msra.mxu0 0.0
    %1636 = vmatprep.mubr.f32.mxu0 0.0
    %1637 = vmatmul.mubr.f32.gmra.mxu0 %v1570
    %v1638 = vpop.f32.mrf.mxu0
    %v1639 = vadd.f32 0.0, %v1638
    %v1640 = vpop.f32.mrf.mxu0
    %1641 = vdwg.mxu0
    %1642 = vrot.lane.b32.xlu0 %v400, 104
    %v1643 = vpop.permute.xlu0 %1642
    %v1646 = vsel %vm405, %v1113, 0
    %1648 = vmatprep.subr.mxu0 0.0
    %1649 = vmatpush1.msra.mxu0 0.0
    %1650 = vmatprep.subr.mxu0 0.0
    %1651 = vmatpush1.msra.mxu0 0.0
    %1652 = vmatprep.subr.mxu0 0.0
    %1653 = vmatpush1.msra.mxu0 0.0
    %1654 = vmatprep.subr.mxu0 0.0
    %1655 = vmatpush1.msra.mxu0 0.0
    %1656 = vmatprep.subr.mxu0 0.0
    %1657 = vmatpush1.msra.mxu0 0.0
    %1658 = vmatprep.subr.mxu0 0.0
    %1659 = vmatpush1.msra.mxu0 0.0
    %1660 = vmatprep.subr.mxu0 0.0
    %1661 = vmatpush1.msra.mxu0 0.0
    %1662 = vmatprep.subr.mxu0 0.0
    %1663 = vmatpush1.msra.mxu0 0.0
    %1664 = vmatprep.subr.mxu0 0.0
    %1665 = vmatpush1.msra.mxu0 0.0
    %1666 = vmatprep.subr.mxu0 0.0
    %1667 = vmatpush1.msra.mxu0 0.0
    %1668 = vmatprep.subr.mxu0 0.0
    %1669 = vmatpush1.msra.mxu0 0.0
    %1670 = vmatprep.subr.mxu0 0.0
    %1671 = vmatpush1.msra.mxu0 0.0
    %1672 = vmatprep.subr.mxu0 0.0
    %1673 = vmatpush1.msra.mxu0 0.0
    %1674 = vmatprep.subr.mxu0 0.0
    %1675 = vmatpush1.msra.mxu0 0.0
    %1676 = vmatprep.subr.mxu0 0.0
    %1677 = vmatpush1.msra.mxu0 0.0
    %1678 = vmatprep.subr.mxu0 0.0
    %1679 = vmatpush1.msra.mxu0 %v1643
    %1680 = vmatprep.subr.mxu0 0.0
    %1681 = vmatpush2.msra.mxu0 0.0
    %1682 = vmatprep.subr.mxu0 0.0
    %1683 = vmatpush2.msra.mxu0 0.0
    %1684 = vmatprep.subr.mxu0 0.0
    %1685 = vmatpush2.msra.mxu0 0.0
    %1686 = vmatprep.subr.mxu0 0.0
    %1687 = vmatpush2.msra.mxu0 0.0
    %1688 = vmatprep.subr.mxu0 0.0
    %1689 = vmatpush2.msra.mxu0 0.0
    %1690 = vmatprep.subr.mxu0 0.0
    %1691 = vmatpush2.msra.mxu0 0.0
    %1692 = vmatprep.subr.mxu0 0.0
    %1693 = vmatpush2.msra.mxu0 0.0
    %1694 = vmatprep.subr.mxu0 0.0
    %1695 = vmatpush2.msra.mxu0 0.0
    %1696 = vmatprep.subr.mxu0 0.0
    %1697 = vmatpush2.msra.mxu0 0.0
    %1698 = vmatprep.subr.mxu0 0.0
    %1699 = vmatpush2.msra.mxu0 0.0
    %1700 = vmatprep.subr.mxu0 0.0
    %1701 = vmatpush2.msra.mxu0 0.0
    %1702 = vmatprep.subr.mxu0 0.0
    %1703 = vmatpush2.msra.mxu0 0.0
    %1704 = vmatprep.subr.mxu0 0.0
    %1705 = vmatpush2.msra.mxu0 0.0
    %1706 = vmatprep.subr.mxu0 0.0
    %1707 = vmatpush2.msra.mxu0 0.0
    %1708 = vmatprep.subr.mxu0 0.0
    %1709 = vmatpush2.msra.mxu0 0.0
    %1710 = vmatprep.subr.mxu0 0.0
    %1711 = vmatpush2.msra.mxu0 0.0
    %1712 = vmatprep.mubr.f32.mxu0 0.0
    %1713 = vmatmul.mubr.f32.gmra.mxu0 %v1646
    %v1714 = vpop.f32.mrf.mxu0
    %v1715 = vadd.f32 0.0, %v1714
    %v1716 = vpop.f32.mrf.mxu0
    %1717 = vdwg.mxu0
    %1720 = vrot.lane.b32.xlu0 %v1334, 8
    %v1721 = vpop.permute.xlu0 %1720
    %1722 = vrot.lane.b32.xlu0 %v1411, 8
    %v1723 = vpop.permute.xlu0 %1722
    %1728 = vrot.lane.b32.xlu0 %v1487, 16
    %v1729 = vpop.permute.xlu0 %1728
    %1730 = vrot.lane.b32.xlu0 %v1563, 16
    %v1731 = vpop.permute.xlu0 %1730
    %1736 = vrot.lane.b32.xlu0 %v1639, 24
    %v1737 = vpop.permute.xlu0 %1736
    %1738 = vrot.lane.b32.xlu0 %v1715, 24
    %v1739 = vpop.permute.xlu0 %1738
    %v1742 = vsel %vm405, %v1184, %v1721
    %v1743 = vsel %vm405, %v1257, %v1723
    %vm1744 = vcmask 130048
    %v1745 = vsel %vm1744, %v1742, %v1729
    %v1746 = vsel %vm1744, %v1743, %v1731
    %vm1747 = vcmask 195584
    %v1748 = vsel %vm1747, %v1745, %v1737
    %v1749 = vsel %vm1747, %v1746, %v1739
    %v1750 = vld [vmem:[#allocation13] sm:$0xff]
    %v1751 = vld [vmem:[#allocation13 + $0x8] sm:$0xff]
    %v1752 = vld [vmem:[#allocation13 + $0x10] sm:$0xff]
    %v1753 = vld [vmem:[#allocation13 + $0x18] sm:$0xff]
    %v1754 = vlaneseq
    %v1755 = vshrl.u32 %v1754, 7
    %v1756 = vsub.s32 3, %v1755
    %v1757 = vrot.slane %v128, %v1756
    %v1759 = vsel %vm139, %v1748, 0
    %v1762 = vsel %vm139, %v1749, 0
    %1764 = vmatprep.subr.mxu0 0.0
    %1765 = vmatpush1.msra.mxu0 0.0
    %1766 = vmatprep.subr.mxu0 0.0
    %1767 = vmatpush1.msra.mxu0 0.0
    %1768 = vmatprep.subr.mxu0 0.0
    %1769 = vmatpush1.msra.mxu0 0.0
    %1770 = vmatprep.subr.mxu0 0.0
    %1771 = vmatpush1.msra.mxu0 0.0
    %1772 = vmatprep.subr.mxu0 0.0
    %1773 = vmatpush1.msra.mxu0 0.0
    %1774 = vmatprep.subr.mxu0 0.0
    %1775 = vmatpush1.msra.mxu0 0.0
    %1776 = vmatprep.subr.mxu0 0.0
    %1777 = vmatpush1.msra.mxu0 0.0
    %1778 = vmatprep.subr.mxu0 0.0
    %1779 = vmatpush1.msra.mxu0 0.0
    %1780 = vmatprep.subr.mxu0 0.0
    %1781 = vmatpush1.msra.mxu0 0.0
    %1782 = vmatprep.subr.mxu0 0.0
    %1783 = vmatpush1.msra.mxu0 0.0
    %1784 = vmatprep.subr.mxu0 0.0
    %1785 = vmatpush1.msra.mxu0 0.0
    %1786 = vmatprep.subr.mxu0 0.0
    %1787 = vmatpush1.msra.mxu0 0.0
    %1788 = vmatprep.subr.mxu0 0.0
    %1789 = vmatpush1.msra.mxu0 %v1753
    %1790 = vmatprep.subr.mxu0 0.0
    %1791 = vmatpush1.msra.mxu0 %v1752
    %1792 = vmatprep.subr.mxu0 0.0
    %1793 = vmatpush1.msra.mxu0 %v1751
    %1794 = vmatprep.subr.mxu0 0.0
    %1795 = vmatpush1.msra.mxu0 %v1750
    %1796 = vmatprep.subr.mxu0 0.0
    %1797 = vmatpush2.msra.mxu0 0.0
    %1798 = vmatprep.subr.mxu0 0.0
    %1799 = vmatpush2.msra.mxu0 0.0
    %1800 = vmatprep.subr.mxu0 0.0
    %1801 = vmatpush2.msra.mxu0 0.0
    %1802 = vmatprep.subr.mxu0 0.0
    %1803 = vmatpush2.msra.mxu0 0.0
    %1804 = vmatprep.subr.mxu0 0.0
    %1805 = vmatpush2.msra.mxu0 0.0
    %1806 = vmatprep.subr.mxu0 0.0
    %1807 = vmatpush2.msra.mxu0 0.0
    %1808 = vmatprep.subr.mxu0 0.0
    %1809 = vmatpush2.msra.mxu0 0.0
    %1810 = vmatprep.subr.mxu0 0.0
    %1811 = vmatpush2.msra.mxu0 0.0
    %1812 = vmatprep.subr.mxu0 0.0
    %1813 = vmatpush2.msra.mxu0 0.0
    %1814 = vmatprep.subr.mxu0 0.0
    %1815 = vmatpush2.msra.mxu0 0.0
    %1816 = vmatprep.subr.mxu0 0.0
    %1817 = vmatpush2.msra.mxu0 0.0
    %1818 = vmatprep.subr.mxu0 0.0
    %1819 = vmatpush2.msra.mxu0 0.0
    %1820 = vmatprep.subr.mxu0 0.0
    %1821 = vmatpush2.msra.mxu0 0.0
    %1822 = vmatprep.subr.mxu0 0.0
    %1823 = vmatpush2.msra.mxu0 0.0
    %1824 = vmatprep.subr.mxu0 0.0
    %1825 = vmatpush2.msra.mxu0 0.0
    %1826 = vmatprep.subr.mxu0 0.0
    %1827 = vmatpush2.msra.mxu0 0.0
    %1828 = vmatprep.mubr.f32.mxu0 0.0
    %1829 = vmatmul.mubr.f32.gmra.mxu0 %v1759
    %v1830 = vpop.f32.mrf.mxu0
    %v1831 = vadd.f32 %v1757, %v1830
    %v1832 = vpop.f32.mrf.mxu0
    %1833 = vmatprep.mubr.f32.mxu0 0.0
    %1834 = vmatmul.mubr.f32.gmra.mxu0 %v1762
    %v1835 = vpop.f32.mrf.mxu0
    %v1836 = vadd.f32 %v1757, %v1835
    %v1837 = vpop.f32.mrf.mxu0
    %1838 = vdwg.mxu0
    %v1839 = vadd.f32 %v129, %v1831
    %v1840 = vadd.f32 %v130, %v1836
    %v1841 = vsel %vm139, %v1839, 0.0
    %1842 = vadd.xlane.f32.xlu0 %v1841
    %v1843 = vpop.xlane.xlu0 %1842
    %v1844 = vsel %vm139, %v1840, 0.0
    %1845 = vadd.xlane.f32.xlu0 %v1844
    %v1846 = vpop.xlane.xlu0 %1845
    %v1847 = vrcp.pop 32.0
    %v1848 = vmul.f32 %v1843, %v1847
    %v1849 = vmul.f32 %v1846, %v1847
    %v1850 = vsub.f32 %v1839, %v1848
    %v1851 = vsub.f32 %v1840, %v1849
    %v1852 = vmul.f32 %v1850, %v1850
    %v1853 = vmul.f32 %v1851, %v1851
    %v1854 = vsel %vm139, %v1852, 0.0
    %1855 = vadd.xlane.f32.xlu0 %v1854
    %v1856 = vpop.xlane.xlu0 %1855
    %v1857 = vsel %vm139, %v1853, 0.0
    %1858 = vadd.xlane.f32.xlu0 %v1857
    %v1859 = vpop.xlane.xlu0 %1858
    %v1860 = vmul.f32 %v1856, %v1847
    %v1861 = vmul.f32 %v1859, %v1847
    %v1862 = vadd.f32 %v1860, 1e-05
    %v1863 = vadd.f32 %v1861, 1e-05
    %v1864 = vrsqrt.pop %v1862
    %v1865 = vrsqrt.pop %v1863
    %v1866 = vmul.f32 %v1850, %v1864
    %v1867 = vmul.f32 %v1851, %v1865
    %v1868 = vlaneseq
    %v1869 = vshrl.u32 %v1868, 7
    %v1870 = vsub.s32 4, %v1869
    %v1871 = vrot.slane %v128, %v1870
    %v1872 = vmul.f32 %v1866, %v1871
    %v1873 = vmul.f32 %v1867, %v1871
    %v1874 = vlaneseq
    %v1875 = vshrl.u32 %v1874, 7
    %v1876 = vsub.s32 5, %v1875
    %v1877 = vrot.slane %v128, %v1876
    %v1878 = vadd.f32 %v1872, %v1877
    %v1879 = vadd.f32 %v1873, %v1877
    %v1880 = vcombine.high %v1878, 0.0
    %v1882 = vunpack.c.l.s4 1983009808
    %v1883 = vunpack.c.0.s8 %v1882
    %v1884 = vlaneseq
    %v1885 = vshrl.u32 %v1884, 7
    %v1886 = vsub.s32 %v1883, %v1885
    %v1887 = vrot.slane %v1878, %v1886
    %v1889 = vunpack.c.l.s4 1983009808
    %v1890 = vunpack.c.0.s8 %v1889
    %v1891 = vlaneseq
    %v1892 = vshrl.u32 %v1891, 7
    %v1893 = vsub.s32 %v1890, %v1892
    %v1894 = vrot.slane %v1880, %v1893
    %v1895 = vcombine.high %v1887, 0.0
    %v1897 = vunpack.c.l.s4 1934713408
    %v1898 = vunpack.c.0.s8 %v1897
    %v1899 = vlaneseq
    %v1900 = vshrl.u32 %v1899, 7
    %v1901 = vsub.s32 %v1898, %v1900
    %v1902 = vrot.slane %v1887, %v1901
    %v1904 = vunpack.c.l.s4 1934713408
    %v1905 = vunpack.c.0.s8 %v1904
    %v1906 = vlaneseq
    %v1907 = vshrl.u32 %v1906, 7
    %v1908 = vsub.s32 %v1905, %v1907
    %v1909 = vrot.slane %v1895, %v1908
    %v1910 = vcombine.high %v1894, 0.0
    %v1912 = vunpack.c.l.s4 1934713408
    %v1913 = vunpack.c.0.s8 %v1912
    %v1914 = vlaneseq
    %v1915 = vshrl.u32 %v1914, 7
    %v1916 = vsub.s32 %v1913, %v1915
    %v1917 = vrot.slane %v1894, %v1916
    %v1919 = vunpack.c.l.s4 1934713408
    %v1920 = vunpack.c.0.s8 %v1919
    %v1921 = vlaneseq
    %v1922 = vshrl.u32 %v1921, 7
    %v1923 = vsub.s32 %v1920, %v1922
    %v1924 = vrot.slane %v1910, %v1923
    %v1925 = vcombine.high %v1902, 0.0
    %v1926 = vcombine.high %v1909, 0.0
    %v1927 = vcombine.high %v1917, 0.0
    %v1928 = vcombine.high %v1924, 0.0
    %v1929 = vcombine.high %v1879, 0.0
    %v1931 = vunpack.c.l.s4 1983009808
    %v1932 = vunpack.c.0.s8 %v1931
    %v1933 = vlaneseq
    %v1934 = vshrl.u32 %v1933, 7
    %v1935 = vsub.s32 %v1932, %v1934
    %v1936 = vrot.slane %v1879, %v1935
    %v1938 = vunpack.c.l.s4 1983009808
    %v1939 = vunpack.c.0.s8 %v1938
    %v1940 = vlaneseq
    %v1941 = vshrl.u32 %v1940, 7
    %v1942 = vsub.s32 %v1939, %v1941
    %v1943 = vrot.slane %v1929, %v1942
    %v1944 = vcombine.high %v1936, 0.0
    %v1946 = vunpack.c.l.s4 1934713408
    %v1947 = vunpack.c.0.s8 %v1946
    %v1948 = vlaneseq
    %v1949 = vshrl.u32 %v1948, 7
    %v1950 = vsub.s32 %v1947, %v1949
    %v1951 = vrot.slane %v1936, %v1950
    %v1953 = vunpack.c.l.s4 1934713408
    %v1954 = vunpack.c.0.s8 %v1953
    %v1955 = vlaneseq
    %v1956 = vshrl.u32 %v1955, 7
    %v1957 = vsub.s32 %v1954, %v1956
    %v1958 = vrot.slane %v1944, %v1957
    %v1959 = vcombine.high %v1943, 0.0
    %v1961 = vunpack.c.l.s4 1934713408
    %v1962 = vunpack.c.0.s8 %v1961
    %v1963 = vlaneseq
    %v1964 = vshrl.u32 %v1963, 7
    %v1965 = vsub.s32 %v1962, %v1964
    %v1966 = vrot.slane %v1943, %v1965
    %v1968 = vunpack.c.l.s4 1934713408
    %v1969 = vunpack.c.0.s8 %v1968
    %v1970 = vlaneseq
    %v1971 = vshrl.u32 %v1970, 7
    %v1972 = vsub.s32 %v1969, %v1971
    %v1973 = vrot.slane %v1959, %v1972
    %v1974 = vcombine.high %v1951, 0.0
    %v1975 = vcombine.high %v1958, 0.0
    %v1976 = vcombine.high %v1966, 0.0
    %v1977 = vcombine.high %v1973, 0.0
    %1980 = vrot.lane.b32.xlu0 %v1925, 32
    %v1981 = vpop.permute.xlu0 %1980
    %1982 = vrot.lane.b32.xlu0 %v1974, 32
    %v1983 = vpop.permute.xlu0 %1982
    %1988 = vrot.lane.b32.xlu0 %v1909, 64
    %v1989 = vpop.permute.xlu0 %1988
    %1990 = vrot.lane.b32.xlu0 %v1958, 64
    %v1991 = vpop.permute.xlu0 %1990
    %1996 = vrot.lane.b32.xlu0 %v1926, 96
    %v1997 = vpop.permute.xlu0 %1996
    %1998 = vrot.lane.b32.xlu0 %v1975, 96
    %v1999 = vpop.permute.xlu0 %1998
    %2004 = vrot.lane.b32.xlu0 %v1927, 32
    %v2005 = vpop.permute.xlu0 %2004
    %2006 = vrot.lane.b32.xlu0 %v1976, 32
    %v2007 = vpop.permute.xlu0 %2006
    %2012 = vrot.lane.b32.xlu0 %v1924, 64
    %v2013 = vpop.permute.xlu0 %2012
    %2014 = vrot.lane.b32.xlu0 %v1973, 64
    %v2015 = vpop.permute.xlu0 %2014
    %2020 = vrot.lane.b32.xlu0 %v1928, 96
    %v2021 = vpop.permute.xlu0 %2020
    %2022 = vrot.lane.b32.xlu0 %v1977, 96
    %v2023 = vpop.permute.xlu0 %2022
    %v2026 = vsel %vm139, %v1902, %v1981
    %v2027 = vsel %vm139, %v1951, %v1983
    %vm2028 = vcmask 523264
    %v2029 = vsel %vm2028, %v2026, %v1989
    %v2030 = vsel %vm2028, %v2027, %v1991
    %vm2031 = vcmask 785408
    %v2032 = vsel %vm2031, %v2029, %v1997
    %v2033 = vsel %vm2031, %v2030, %v1999
    %v2034 = vsel %vm139, %v1917, %v2005
    %v2035 = vsel %vm139, %v1966, %v2007
    %v2036 = vsel %vm2028, %v2034, %v2013
    %v2037 = vsel %vm2028, %v2035, %v2015
    %v2038 = vsel %vm2031, %v2036, %v2021
    %v2039 = vsel %vm2031, %v2037, %v2023
    %v2044 = vcombine.low %v2032, %v2038
    %v2046 = vunpack.c.l.s4 1966171168
    %v2047 = vunpack.c.0.s8 %v2046
    %v2048 = vlaneseq
    %v2049 = vshrl.u32 %v2048, 7
    %v2050 = vsub.s32 %v2047, %v2049
    %v2051 = vrot.slane %v2044, %v2050
    %v2053 = vunpack.c.l.s4 1966171168
    %v2054 = vunpack.c.0.s8 %v2053
    %v2055 = vlaneseq
    %v2056 = vshrl.u32 %v2055, 7
    %v2057 = vsub.s32 %v2054, %v2056
    %v2058 = vrot.slane %v2051, %v2057
    %v2059 = vcombine.low %v2033, %v2039
    %v2061 = vunpack.c.l.s4 1966171168
    %v2062 = vunpack.c.0.s8 %v2061
    %v2063 = vlaneseq
    %v2064 = vshrl.u32 %v2063, 7
    %v2065 = vsub.s32 %v2062, %v2064
    %v2066 = vrot.slane %v2059, %v2065
    %v2068 = vunpack.c.l.s4 1966171168
    %v2069 = vunpack.c.0.s8 %v2068
    %v2070 = vlaneseq
    %v2071 = vshrl.u32 %v2070, 7
    %v2072 = vsub.s32 %v2069, %v2071
    %v2073 = vrot.slane %v2066, %v2072
    %v2076 = vlaneseq
    %vm2077 = vcmp.ge.s32.totalorder %v2076, 0
    %vm2078 = vcmp.lt.s32.totalorder %v2076, 256
    %vm2079 = vmand %vm2077, %vm2078
    %2080 = vst.msk [vmem:[#allocation14] sm:$0x3] %vm2079, %v2058
    %2081 = vst.msk [vmem:[#allocation14 + $0x2] sm:$0x3] %vm2079, %v2073
    %v2082 = vadd.f32 %v1099, %v1103
    %v2083 = vadd.f32 %v1101, %v1105
    %v2084 = vadd.f32 %v2082, %v1107
    %v2085 = vadd.f32 %v2083, %v1109
    %v2086 = vadd.f32 %v2084, %v1111
    %v2087 = vadd.f32 %v2085, %v1113
    %v2088 = vmul.f32 %v2086, 0.25
    %v2089 = vmul.f32 %v2087, 0.25
    %v2090 = vcombine.high %v2088, 0.0
    %v2092 = vunpack.c.l.s4 1983009808
    %v2093 = vunpack.c.0.s8 %v2092
    %v2094 = vlaneseq
    %v2095 = vshrl.u32 %v2094, 7
    %v2096 = vsub.s32 %v2093, %v2095
    %v2097 = vrot.slane %v2088, %v2096
    %v2099 = vunpack.c.l.s4 1983009808
    %v2100 = vunpack.c.0.s8 %v2099
    %v2101 = vlaneseq
    %v2102 = vshrl.u32 %v2101, 7
    %v2103 = vsub.s32 %v2100, %v2102
    %v2104 = vrot.slane %v2090, %v2103
    %v2105 = vcombine.high %v2097, 0.0
    %v2107 = vunpack.c.l.s4 1934713408
    %v2108 = vunpack.c.0.s8 %v2107
    %v2109 = vlaneseq
    %v2110 = vshrl.u32 %v2109, 7
    %v2111 = vsub.s32 %v2108, %v2110
    %v2112 = vrot.slane %v2097, %v2111
    %v2114 = vunpack.c.l.s4 1934713408
    %v2115 = vunpack.c.0.s8 %v2114
    %v2116 = vlaneseq
    %v2117 = vshrl.u32 %v2116, 7
    %v2118 = vsub.s32 %v2115, %v2117
    %v2119 = vrot.slane %v2105, %v2118
    %v2120 = vcombine.high %v2104, 0.0
    %v2122 = vunpack.c.l.s4 1934713408
    %v2123 = vunpack.c.0.s8 %v2122
    %v2124 = vlaneseq
    %v2125 = vshrl.u32 %v2124, 7
    %v2126 = vsub.s32 %v2123, %v2125
    %v2127 = vrot.slane %v2104, %v2126
    %v2129 = vunpack.c.l.s4 1934713408
    %v2130 = vunpack.c.0.s8 %v2129
    %v2131 = vlaneseq
    %v2132 = vshrl.u32 %v2131, 7
    %v2133 = vsub.s32 %v2130, %v2132
    %v2134 = vrot.slane %v2120, %v2133
    %v2135 = vcombine.high %v2112, 0.0
    %v2136 = vcombine.high %v2119, 0.0
    %v2137 = vcombine.high %v2127, 0.0
    %v2138 = vcombine.high %v2134, 0.0
    %v2139 = vcombine.high %v2089, 0.0
    %v2141 = vunpack.c.l.s4 1983009808
    %v2142 = vunpack.c.0.s8 %v2141
    %v2143 = vlaneseq
    %v2144 = vshrl.u32 %v2143, 7
    %v2145 = vsub.s32 %v2142, %v2144
    %v2146 = vrot.slane %v2089, %v2145
    %v2148 = vunpack.c.l.s4 1983009808
    %v2149 = vunpack.c.0.s8 %v2148
    %v2150 = vlaneseq
    %v2151 = vshrl.u32 %v2150, 7
    %v2152 = vsub.s32 %v2149, %v2151
    %v2153 = vrot.slane %v2139, %v2152
    %v2154 = vcombine.high %v2146, 0.0
    %v2156 = vunpack.c.l.s4 1934713408
    %v2157 = vunpack.c.0.s8 %v2156
    %v2158 = vlaneseq
    %v2159 = vshrl.u32 %v2158, 7
    %v2160 = vsub.s32 %v2157, %v2159
    %v2161 = vrot.slane %v2146, %v2160
    %v2163 = vunpack.c.l.s4 1934713408
    %v2164 = vunpack.c.0.s8 %v2163
    %v2165 = vlaneseq
    %v2166 = vshrl.u32 %v2165, 7
    %v2167 = vsub.s32 %v2164, %v2166
    %v2168 = vrot.slane %v2154, %v2167
    %v2169 = vcombine.high %v2153, 0.0
    %v2171 = vunpack.c.l.s4 1934713408
    %v2172 = vunpack.c.0.s8 %v2171
    %v2173 = vlaneseq
    %v2174 = vshrl.u32 %v2173, 7
    %v2175 = vsub.s32 %v2172, %v2174
    %v2176 = vrot.slane %v2153, %v2175
    %v2178 = vunpack.c.l.s4 1934713408
    %v2179 = vunpack.c.0.s8 %v2178
    %v2180 = vlaneseq
    %v2181 = vshrl.u32 %v2180, 7
    %v2182 = vsub.s32 %v2179, %v2181
    %v2183 = vrot.slane %v2169, %v2182
    %v2184 = vcombine.high %v2161, 0.0
    %v2185 = vcombine.high %v2168, 0.0
    %v2186 = vcombine.high %v2176, 0.0
    %v2187 = vcombine.high %v2183, 0.0
    %2190 = vrot.lane.b32.xlu0 %v2135, 8
    %v2191 = vpop.permute.xlu0 %2190
    %2192 = vrot.lane.b32.xlu0 %v2184, 8
    %v2193 = vpop.permute.xlu0 %2192
    %2198 = vrot.lane.b32.xlu0 %v2119, 16
    %v2199 = vpop.permute.xlu0 %2198
    %2200 = vrot.lane.b32.xlu0 %v2168, 16
    %v2201 = vpop.permute.xlu0 %2200
    %2206 = vrot.lane.b32.xlu0 %v2136, 24
    %v2207 = vpop.permute.xlu0 %2206
    %2208 = vrot.lane.b32.xlu0 %v2185, 24
    %v2209 = vpop.permute.xlu0 %2208
    %2214 = vrot.lane.b32.xlu0 %v2127, 32
    %v2215 = vpop.permute.xlu0 %2214
    %2216 = vrot.lane.b32.xlu0 %v2176, 32
    %v2217 = vpop.permute.xlu0 %2216
    %2222 = vrot.lane.b32.xlu0 %v2137, 40
    %v2223 = vpop.permute.xlu0 %2222
    %2224 = vrot.lane.b32.xlu0 %v2186, 40
    %v2225 = vpop.permute.xlu0 %2224
    %2230 = vrot.lane.b32.xlu0 %v2134, 48
    %v2231 = vpop.permute.xlu0 %2230
    %2232 = vrot.lane.b32.xlu0 %v2183, 48
    %v2233 = vpop.permute.xlu0 %2232
    %2238 = vrot.lane.b32.xlu0 %v2138, 56
    %v2239 = vpop.permute.xlu0 %2238
    %2240 = vrot.lane.b32.xlu0 %v2187, 56
    %v2241 = vpop.permute.xlu0 %2240
    %v2244 = vsel %vm405, %v2112, %v2191
    %v2245 = vsel %vm405, %v2161, %v2193
    %v2246 = vsel %vm1744, %v2244, %v2199
    %v2247 = vsel %vm1744, %v2245, %v2201
    %v2248 = vsel %vm1747, %v2246, %v2207
    %v2249 = vsel %vm1747, %v2247, %v2209
    %v2250 = vsel %vm139, %v2248, %v2215
    %v2251 = vsel %vm139, %v2249, %v2217
    %vm2252 = vcmask 326656
    %v2253 = vsel %vm2252, %v2250, %v2223
    %v2254 = vsel %vm2252, %v2251, %v2225
    %vm2255 = vcmask 392192
    %v2256 = vsel %vm2255, %v2253, %v2231
    %v2257 = vsel %vm2255, %v2254, %v2233
    %vm2258 = vcmask 457728
    %v2259 = vsel %vm2258, %v2256, %v2239
    %v2260 = vsel %vm2258, %v2257, %v2241
    %vm2261 = vcmask 516096
    %2262 = vst.msk [vmem:[#allocation15] sm:$0x1] %vm2261, %v2259
    %2263 = vst.msk [vmem:[#allocation15 + $0x1] sm:$0x1] %vm2261, %v2260
    // Predicated region
    $region62: #{tpu_custom_call.1} parent=1 // pred_check
      _
    $region63: #{tpu_custom_call.1} parent=1 // pred_check_branch
      %2265 = sbr.rel (0) target = $region65
    $region64: #{tpu_custom_call.1} parent=1 // pred_region
      %s2267 = ssub.s32 64, 64
      %2268 = vsyncadd [#allocation4], %s2267
      %s2269 = sshll.u32 [#allocation14], 4
      %s2270 = int_to_ptr.vmem [resolvable:$true] %s2269
      %2275 = dma.vmem_to_hbm [thread:$0]  %s2270, 64, %s8, [#allocation4], 32, 32, 2
    $region65: #{tpu_custom_call.1} parent=1 // pred_fallthru
      _
    // Predicated region
    $region66: #{tpu_custom_call.1} parent=1 // pred_check
      _
    $region67: #{tpu_custom_call.1} parent=1 // pred_check_branch
      %2277 = sbr.rel (0) target = $region69
    $region68: #{tpu_custom_call.1} parent=1 // pred_region
      %s2279 = ssub.s32 32, 32
      %2280 = vsyncadd [#allocation16], %s2279
      %s2281 = sshll.u32 [#allocation15], 4
      %s2282 = int_to_ptr.vmem [resolvable:$true] %s2281
      %2287 = dma.vmem_to_hbm [thread:$0]  %s2282, 32, %s9, [#allocation16], 16, 16, 1
    $region69: #{tpu_custom_call.1} parent=1 // pred_fallthru
      _
    // Predicated region
    $region70: #{tpu_custom_call.1} parent=1 // pred_check
      _
    $region71: #{tpu_custom_call.1} parent=1 // pred_check_branch
      %2289 = sbr.rel (0) target = $region73
    $region72: #{tpu_custom_call.1} parent=1 // pred_region
      %2290 = dma.done [#allocation4], 64
    $region73: #{tpu_custom_call.1} parent=1 // pred_fallthru
      _
    // Predicated region
    $region74: #{tpu_custom_call.1} parent=1 // pred_check
      _
    $region75: #{tpu_custom_call.1} parent=1 // pred_check_branch
      %2292 = sbr.rel (0) target = $region77
    $region76: #{tpu_custom_call.1} parent=1 // pred_region
      %2293 = dma.done [#allocation16], 32
    $region77: #{tpu_custom_call.1} parent=1 // pred_fallthru
      _
    %2294 = vsyncpa [#allocation3], 1
    %2295 = vsyncpa [#allocation6], 1
    %2296 = vsyncpa [#allocation9], 1
    %2297 = vsyncpa [#allocation12], 1
    %2298 = vsyncpa [#allocation4], 1
    %2299 = vsyncpa [#allocation16], 1

</llo_original>
